<compile_context>
chip_gen: v7x
topology: tpu7x:2x2x1
jax: 0.10.0
libtpu: 0.0.40
codegen_flags: <defaults>
</compile_context>

<pallas_src>
import functools
import math

import numpy as np
import jax
import jax.numpy as jnp
from jax import lax
from jax.experimental import pallas as pl
from jax.experimental.pallas import tpu as pltpu  # noqa: F401  (TPU backend / VMEM default path)


# -----------------------------------------------------------------------------
# Fused Pallas kernel: BiGRU + multiTimeAttention + z0_to_obs MLP
# -----------------------------------------------------------------------------
def dec_mtan_fused_kernel(z2d_ref,            # (Lref*B, Din)   row = t*B + b (time-major)
                          q2d_ref,            # (B*Lq, E)       row = b*Lq + q
                          kemb_ref,           # (Lref, E)       shared key time-embedding
                          wih_ref, bih_ref,   # (Din, 6H), (1, 6H)   [fwd r,z,n | bwd r,z,n]
                          whh_ref, bhh_ref,   # (2H, 6H) block-diag, (1, 6H)
                          wq_ref, bq_ref,     # (E, E), (1, E)
                          wk_ref, bk_ref,     # (E, E), (1, E)
                          wfold_ref, bfold_ref,  # (h*2H, 50), (1, 50)   (Wo folded into W1)
                          w2_ref, b2_ref,     # (50, input_dim), (1, input_dim)
                          o_ref,              # (B*Lq, input_dim)
                          *, B, Lref, Lq, H, E, num_heads, input_dim):
    f32 = jnp.float32
    H3, H6 = 3 * H, 6 * H
    ek = E // num_heads
    scale = 1.0 / math.sqrt(ek)

    # ---------------- BiGRU ----------------
    # Hoisted input projection: all time steps, both directions, all gates in one dot.
    x_all = jnp.dot(z2d_ref[...], wih_ref[...],
                    preferred_element_type=f32) + bih_ref[...]        # (Lref*B, 6H)

    whh = whh_ref[...]                                                # (2H, 6H)
    bhh = bhh_ref[...]                                                # (1, 6H)

    def gru_gates(xi, hi, h_prev):
        # PyTorch GRU gate order: r (reset), z (update), n (new)
        #   r = sigmoid(x_r + h_r); z = sigmoid(x_z + h_z)
        #   n = tanh(x_n + r * h_n); h' = (1-z)*n + z*h_prev
        r = jax.nn.sigmoid(xi[:, 0:H] + hi[:, 0:H])
        zt = jax.nn.sigmoid(xi[:, H:2 * H] + hi[:, H:2 * H])
        n = jnp.tanh(xi[:, 2 * H:3 * H] + r * hi[:, 2 * H:3 * H])
        return (1.0 - zt) * n + zt * h_prev

    hf = jnp.zeros((B, H), f32)
    hb = jnp.zeros((B, H), f32)
    hf_at = [None] * Lref    # forward hidden, indexed by time
    hb_at = [None] * Lref    # backward hidden, indexed by time

    # Fully unrolled recurrence: ONE (B,2H)@(2H,6H) matmul per step (both directions).
    for t in range(Lref):
        tb = Lref - 1 - t
        xf = x_all[t * B:(t + 1) * B, 0:H3]            # fwd gates input @ time t
        xb = x_all[tb * B:(tb + 1) * B, H3:H6]         # bwd gates input @ time tb
        hcat = jnp.concatenate([hf, hb], axis=-1)      # (B, 2H)
        hh = jnp.dot(hcat, whh, preferred_element_type=f32) + bhh     # (B, 6H)
        hf = gru_gates(xf, hh[:, 0:H3], hf)
        hb = gru_gates(xb, hh[:, H3:H6], hb)
        hf_at[t] = hf
        hb_at[tb] = hb

    # ---------------- multiTimeAttention ----------------
    # Query / key projections, batched over all (batch, query-time) rows at once.
    qp = jnp.dot(q2d_ref[...], wq_ref[...],
                 preferred_element_type=f32) + bq_ref[...]            # (B*Lq, E)
    kp = jnp.dot(kemb_ref[...], wk_ref[...],
                 preferred_element_type=f32) + bk_ref[...]            # (Lref, E)

    # Scores + softmax for all batches at once (keys shared across batch).
    # lax.dot_general contracts the last dim of q and k -> no materialized k^T.
    probs = []
    for hd in range(num_heads):
        qh = qp[:, hd * ek:(hd + 1) * ek]                             # (B*Lq, ek)
        kh = kp[:, hd * ek:(hd + 1) * ek]                             # (Lref, ek)
        s = lax.dot_general(qh, kh, dimension_numbers=(((1,), (1,)), ((), ())),
                            preferred_element_type=f32) * scale       # (B*Lq, Lref)
        s = s - jnp.max(s, axis=-1, keepdims=True)
        e = jnp.exp(s)
        probs.append(e * pl.reciprocal(jnp.sum(e, axis=-1, keepdims=True),
                                       approx=True))

    # Per-batch value (GRU output) gather + attention-weighted sum.
    # All slices / concats stay strictly 2-D (proven-clean lowering path).
    x_rows = []
    for b in range(B):
        vf = jnp.concatenate([hf_at[t][b:b + 1, :] for t in range(Lref)], axis=0)  # (Lref, H)
        vb = jnp.concatenate([hb_at[t][b:b + 1, :] for t in range(Lref)], axis=0)  # (Lref, H)
        val = jnp.concatenate([vf, vb], axis=-1)                                   # (Lref, 2H)
        outs = [jnp.dot(probs[hd][b * Lq:(b + 1) * Lq, :], val,
                        preferred_element_type=f32) for hd in range(num_heads)]
        x_rows.append(outs[0] if num_heads == 1
                      else jnp.concatenate(outs, axis=-1))                         # (Lq, h*2H)
    x = jnp.concatenate(x_rows, axis=0)                                            # (B*Lq, h*2H)

    # ---------------- output MLP (Wo folded into W1 in the wrapper) ----------------
    hmid = jnp.maximum(
        jnp.dot(x, wfold_ref[...], preferred_element_type=f32) + bfold_ref[...], 0.0)
    y = jnp.dot(hmid, w2_ref[...], preferred_element_type=f32) + b2_ref[...]
    o_ref[...] = y.astype(o_ref.dtype)


# -----------------------------------------------------------------------------
# Glue: fixed time embedding (small elementwise, plain JAX)
# -----------------------------------------------------------------------------
def fixed_time_embedding(pos, d_model):
    # pos: (B, L) float32
    position = 48.0 * pos[..., None]                                       # (B, L, 1)
    div_term = jnp.exp(jnp.arange(0, d_model, 2, dtype=jnp.float32)
                       * (-np.log(10.0) / d_model))                        # (d_model//2,)
    arg = position * div_term                                              # (B, L, d/2)
    pe = jnp.stack([jnp.sin(arg), jnp.cos(arg)], axis=-1)                  # (B, L, d/2, 2)
    return pe.reshape(pos.shape[0], pos.shape[1], d_model)                 # even: sin, odd: cos


# -----------------------------------------------------------------------------
# Wrapper: parameter packing + single fused pallas_call
# -----------------------------------------------------------------------------
def _pack_gru_params(params):
    def cat_gates(w):   # (3, A, H) -> (A, 3H)  gate order r, z, n
        return jnp.concatenate([w[0], w[1], w[2]], axis=-1)

    def cat_bias(b):    # (3, 1, H) -> (1, 3H)
        return jnp.concatenate([b[0], b[1], b[2]], axis=-1)

    H = params["whh_f"].shape[-1]
    wih_all = jnp.concatenate([cat_gates(params["wih_f"]),
                               cat_gates(params["wih_b"])], axis=-1)       # (Din, 6H)
    bih_all = jnp.concatenate([cat_bias(params["bih_f"]),
                               cat_bias(params["bih_b"])], axis=-1)        # (1, 6H)
    zero = jnp.zeros((H, 3 * H), jnp.float32)
    whh_bd = jnp.concatenate(
        [jnp.concatenate([cat_gates(params["whh_f"]), zero], axis=-1),
         jnp.concatenate([zero, cat_gates(params["whh_b"])], axis=-1)],
        axis=0)                                                            # (2H, 6H) block-diag
    bhh_all = jnp.concatenate([cat_bias(params["bhh_f"]),
                               cat_bias(params["bhh_b"])], axis=-1)        # (1, 6H)
    return wih_all, bih_all, whh_bd, bhh_all


def dec_mtan_rnn_forward(z, time_steps, query_times, params, cfg):
    B, Lref, Din = z.shape
    Lq = time_steps.shape[1]
    H = cfg["nhidden"]
    E = cfg["embed_time"]
    num_heads = cfg["num_heads"]
    input_dim = cfg["input_dim"]

    # One-time parameter packing (cheap, fused into the surrounding jit).
    wih_all, bih_all, whh_bd, bhh_all = _pack_gru_params(params)
    w_fold = params["wo"] @ params["w1"]                    # (h*2H, 50)
    b_fold = params["bo"] @ params["w1"] + params["b1"]     # (1, 50)

    # Time embeddings (glue).
    q_emb = fixed_time_embedding(time_steps, E)               # (B, Lq, E)
    k_emb = fixed_time_embedding(query_times[None, :], E)[0]  # (Lref, E)

    z2d = jnp.transpose(z, (1, 0, 2)).reshape(Lref * B, Din)  # time-major rows t*B + b
    q2d = q_emb.reshape(B * Lq, E)                            # rows b*Lq + q

    kernel = functools.partial(dec_mtan_fused_kernel, B=B, Lref=Lref, Lq=Lq,
                               H=H, E=E, num_heads=num_heads, input_dim=input_dim)
    out2d = pl.pallas_call(
        kernel,
        out_shape=jax.ShapeDtypeStruct((B * Lq, input_dim), jnp.float32),
    )(z2d, q2d, k_emb,
      wih_all, bih_all, whh_bd, bhh_all,
      params["wq"], params["bq"], params["wk"], params["bk"],
      w_fold, b_fold, params["w2"], params["b2"])
    return out2d.reshape(B, Lq, input_dim)


# -----------------------------------------------------------------------------
# Pure-JAX reference (correctness check only; uses unfused params)
# -----------------------------------------------------------------------------
def _gru_dir_ref(z, wih, whh, bih, bhh):
    def step(h, x):
        i_r = x @ wih[0] + bih[0]
        i_z = x @ wih[1] + bih[1]
        i_n = x @ wih[2] + bih[2]
        h_r = h @ whh[0] + bhh[0]
        h_z = h @ whh[1] + bhh[1]
        h_n = h @ whh[2] + bhh[2]
        r = jax.nn.sigmoid(i_r + h_r)
        zt = jax.nn.sigmoid(i_z + h_z)
        n = jnp.tanh(i_n + r * h_n)
        hn = (1.0 - zt) * n + zt * h
        return hn, hn
    h0 = jnp.zeros((z.shape[0], whh.shape[-1]), jnp.float32)
    _, hs = jax.lax.scan(step, h0, jnp.transpose(z, (1, 0, 2)))
    return jnp.transpose(hs, (1, 0, 2))


def reference_forward(z, time_steps, query_times, params, cfg):
    H = cfg["nhidden"]
    E = cfg["embed_time"]
    num_heads = cfg["num_heads"]
    ek = E // num_heads

    out_f = _gru_dir_ref(z, params["wih_f"], params["whh_f"], params["bih_f"], params["bhh_f"])
    out_b = _gru_dir_ref(z[:, ::-1], params["wih_b"], params["whh_b"],
                         params["bih_b"], params["bhh_b"])[:, ::-1]
    value = jnp.concatenate([out_f, out_b], axis=-1)            # (B, Lref, 2H)

    q_emb = fixed_time_embedding(time_steps, E)                 # (B, Lq, E)
    k_emb = fixed_time_embedding(query_times[None, :], E)[0]    # (Lref, E)

    qp = q_emb @ params["wq"] + params["bq"]                    # (B, Lq, E)
    kp = k_emb @ params["wk"] + params["bk"]                    # (Lref, E)
    B, Lq, _ = qp.shape
    Lk = kp.shape[0]
    qh = qp.reshape(B, Lq, num_heads, ek).transpose(0, 2, 1, 3)
    kh = kp.reshape(Lk, num_heads, ek).transpose(1, 0, 2)
    scores = jnp.einsum("bhqe,hke->bhqk", qh, kh) / math.sqrt(ek)
    p = jax.nn.softmax(scores, axis=-1)
    x = jnp.einsum("bhqk,bkv->bhqv", p, value)
    x = x.transpose(0, 2, 1, 3).reshape(B, Lq, -1)
    x = x @ params["wo"] + params["bo"]
    hmid = jax.nn.relu(x @ params["w1"] + params["b1"])
    return hmid @ params["w2"] + params["b2"]


# -----------------------------------------------------------------------------
# Main
# -----------------------------------------------------------------------------
if __name__ == "__main__":
    # Small shapes consistent with the module
    cfg = dict(input_dim=4, latent_dim=4, nhidden=16, embed_time=16, num_heads=1)
    B, Lref, Lq = 2, 8, 16
    Din = 2 * cfg["latent_dim"]     # GRU input dim
    H = cfg["nhidden"]
    E = cfg["embed_time"]
    V = 2 * H                       # value dim / att hidden dim

    key = jax.random.PRNGKey(0)
    ks = jax.random.split(key, 24)

    def rnd(k, shape, scale=0.1):
        return (scale * jax.random.normal(k, shape)).astype(jnp.float32)

    params = {
        # GRU forward direction (gates stacked along leading axis: r, z, n)
        "wih_f": rnd(ks[0], (3, Din, H)), "whh_f": rnd(ks[1], (3, H, H)),
        "bih_f": rnd(ks[2], (3, 1, H)),   "bhh_f": rnd(ks[3], (3, 1, H)),
        # GRU backward direction
        "wih_b": rnd(ks[4], (3, Din, H)), "whh_b": rnd(ks[5], (3, H, H)),
        "bih_b": rnd(ks[6], (3, 1, H)),   "bhh_b": rnd(ks[7], (3, 1, H)),
        # multiTimeAttention linears (stored transposed for right-multiply)
        "wq": rnd(ks[8], (E, E)),  "bq": rnd(ks[9], (1, E)),
        "wk": rnd(ks[10], (E, E)), "bk": rnd(ks[11], (1, E)),
        "wo": rnd(ks[12], (cfg["num_heads"] * V, 2 * H)), "bo": rnd(ks[13], (1, 2 * H)),
        # z0_to_obs MLP
        "w1": rnd(ks[14], (2 * H, 50)), "b1": rnd(ks[15], (1, 50)),
        "w2": rnd(ks[16], (50, cfg["input_dim"])), "b2": rnd(ks[17], (1, cfg["input_dim"])),
    }

    z = jax.random.normal(ks[18], (B, Lref, Din), dtype=jnp.float32)
    time_steps = jax.random.uniform(ks[19], (B, Lq), dtype=jnp.float32)
    query_times = jnp.linspace(0.0, 1.0, Lref, dtype=jnp.float32)   # the registered `query` buffer

    fwd = jax.jit(functools.partial(dec_mtan_rnn_forward, cfg=cfg))
    out = jax.block_until_ready(fwd(z, time_steps, query_times, params))
    assert out.shape == (B, Lq, cfg["input_dim"]), out.shape

    ref = jax.block_until_ready(reference_forward(z, time_steps, query_times, params, cfg))
    np.testing.assert_allclose(np.asarray(out), np.asarray(ref), rtol=2e-2, atol=2e-3)

    print("KERNEL_OK")
</pallas_src>

<mosaic_0001>
module attributes {stable_mosaic.version = 11 : i64} {
  func.func @dec_mtan_fused_kernel(%arg0: memref<16x8xf32, #tpu.memory_space<vmem>>, %arg1: memref<32x16xf32, #tpu.memory_space<vmem>>, %arg2: memref<8x16xf32, #tpu.memory_space<vmem>>, %arg3: memref<8x96xf32, #tpu.memory_space<vmem>>, %arg4: memref<1x96xf32, #tpu.memory_space<vmem>>, %arg5: memref<32x96xf32, #tpu.memory_space<vmem>>, %arg6: memref<1x96xf32, #tpu.memory_space<vmem>>, %arg7: memref<16x16xf32, #tpu.memory_space<vmem>>, %arg8: memref<1x16xf32, #tpu.memory_space<vmem>>, %arg9: memref<16x16xf32, #tpu.memory_space<vmem>>, %arg10: memref<1x16xf32, #tpu.memory_space<vmem>>, %arg11: memref<32x50xf32, #tpu.memory_space<vmem>>, %arg12: memref<1x50xf32, #tpu.memory_space<vmem>>, %arg13: memref<50x4xf32, #tpu.memory_space<vmem>>, %arg14: memref<1x4xf32, #tpu.memory_space<vmem>>, %arg15: memref<32x4xf32, #tpu.memory_space<vmem>>) attributes {dimension_semantics = [], scalar_prefetch = 0 : i64, scratch_operands = 0 : i64, tpu.core_type = #tpu.core_type<tc>} {
    %c0 = arith.constant 0 : index
    %c0_0 = arith.constant 0 : index
    %0 = vector.load %arg0[%c0, %c0_0] : memref<16x8xf32, #tpu.memory_space<vmem>>, vector<16x8xf32>
    %c0_1 = arith.constant 0 : index
    %c0_2 = arith.constant 0 : index
    %1 = vector.load %arg3[%c0_1, %c0_2] : memref<8x96xf32, #tpu.memory_space<vmem>>, vector<8x96xf32>
    %cst = arith.constant dense<0.000000e+00> : vector<16x96xf32>
    %2 = tpu.matmul %0, %1, %cst {dimension_numbers = #tpu.dot_dimension_numbers<[1], [0], [0], [1], [0, 0, 1, 1], [], []>} : vector<16x8xf32>, vector<8x96xf32>, vector<16x96xf32> -> vector<16x96xf32>
    %c0_3 = arith.constant 0 : index
    %c0_4 = arith.constant 0 : index
    %3 = vector.load %arg4[%c0_3, %c0_4] : memref<1x96xf32, #tpu.memory_space<vmem>>, vector<1x96xf32>
    %4 = vector.broadcast %3 : vector<1x96xf32> to vector<16x96xf32>
    %5 = arith.addf %2, %4 : vector<16x96xf32>
    %c0_5 = arith.constant 0 : index
    %c0_6 = arith.constant 0 : index
    %6 = vector.load %arg5[%c0_5, %c0_6] : memref<32x96xf32, #tpu.memory_space<vmem>>, vector<32x96xf32>
    %c0_7 = arith.constant 0 : index
    %c0_8 = arith.constant 0 : index
    %7 = vector.load %arg6[%c0_7, %c0_8] : memref<1x96xf32, #tpu.memory_space<vmem>>, vector<1x96xf32>
    %cst_9 = arith.constant 0.000000e+00 : f32
    %8 = vector.broadcast %cst_9 : f32 to vector<2x16xf32>
    %cst_10 = arith.constant 0.000000e+00 : f32
    %9 = vector.broadcast %cst_10 : f32 to vector<2x16xf32>
    %10 = vector.extract_strided_slice %5 {offsets = [0, 0], sizes = [2, 48], strides = [1, 1]} : vector<16x96xf32> to vector<2x48xf32>
    %11 = vector.extract_strided_slice %5 {offsets = [14, 48], sizes = [2, 48], strides = [1, 1]} : vector<16x96xf32> to vector<2x48xf32>
    %12 = tpu.concatenate %8, %9 in 1 : vector<2x16xf32>, vector<2x16xf32> -> vector<2x32xf32>
    %cst_11 = arith.constant dense<0.000000e+00> : vector<2x96xf32>
    %13 = tpu.matmul %12, %6, %cst_11 {dimension_numbers = #tpu.dot_dimension_numbers<[1], [0], [0], [1], [0, 0, 1, 1], [], []>} : vector<2x32xf32>, vector<32x96xf32>, vector<2x96xf32> -> vector<2x96xf32>
    %14 = vector.broadcast %7 : vector<1x96xf32> to vector<2x96xf32>
    %15 = arith.addf %13, %14 : vector<2x96xf32>
    %16 = vector.extract_strided_slice %15 {offsets = [0, 0], sizes = [2, 48], strides = [1, 1]} : vector<2x96xf32> to vector<2x48xf32>
    %17 = vector.extract_strided_slice %10 {offsets = [0, 0], sizes = [2, 16], strides = [1, 1]} : vector<2x48xf32> to vector<2x16xf32>
    %18 = vector.extract_strided_slice %16 {offsets = [0, 0], sizes = [2, 16], strides = [1, 1]} : vector<2x48xf32> to vector<2x16xf32>
    %19 = arith.addf %17, %18 : vector<2x16xf32>
    %20 = arith.negf %19 : vector<2x16xf32>
    %21 = math.exp %20 : vector<2x16xf32>
    %cst_12 = arith.constant 1.000000e+00 : f32
    %22 = vector.broadcast %cst_12 : f32 to vector<2x16xf32>
    %23 = arith.addf %22, %21 : vector<2x16xf32>
    %24 = arith.divf %22, %23 : vector<2x16xf32>
    %25 = vector.extract_strided_slice %10 {offsets = [0, 16], sizes = [2, 16], strides = [1, 1]} : vector<2x48xf32> to vector<2x16xf32>
    %26 = vector.extract_strided_slice %16 {offsets = [0, 16], sizes = [2, 16], strides = [1, 1]} : vector<2x48xf32> to vector<2x16xf32>
    %27 = arith.addf %25, %26 : vector<2x16xf32>
    %28 = arith.negf %27 : vector<2x16xf32>
    %29 = math.exp %28 : vector<2x16xf32>
    %cst_13 = arith.constant 1.000000e+00 : f32
    %30 = vector.broadcast %cst_13 : f32 to vector<2x16xf32>
    %31 = arith.addf %30, %29 : vector<2x16xf32>
    %32 = arith.divf %30, %31 : vector<2x16xf32>
    %33 = vector.extract_strided_slice %10 {offsets = [0, 32], sizes = [2, 16], strides = [1, 1]} : vector<2x48xf32> to vector<2x16xf32>
    %34 = vector.extract_strided_slice %16 {offsets = [0, 32], sizes = [2, 16], strides = [1, 1]} : vector<2x48xf32> to vector<2x16xf32>
    %35 = arith.mulf %24, %34 : vector<2x16xf32>
    %36 = arith.addf %33, %35 : vector<2x16xf32>
    %37 = math.tanh %36 : vector<2x16xf32>
    %cst_14 = arith.constant 1.000000e+00 : f32
    %38 = vector.broadcast %cst_14 : f32 to vector<2x16xf32>
    %39 = arith.subf %38, %32 : vector<2x16xf32>
    %40 = arith.mulf %39, %37 : vector<2x16xf32>
    %41 = arith.mulf %32, %8 : vector<2x16xf32>
    %42 = arith.addf %40, %41 : vector<2x16xf32>
    %43 = vector.extract_strided_slice %15 {offsets = [0, 48], sizes = [2, 48], strides = [1, 1]} : vector<2x96xf32> to vector<2x48xf32>
    %44 = vector.extract_strided_slice %11 {offsets = [0, 0], sizes = [2, 16], strides = [1, 1]} : vector<2x48xf32> to vector<2x16xf32>
    %45 = vector.extract_strided_slice %43 {offsets = [0, 0], sizes = [2, 16], strides = [1, 1]} : vector<2x48xf32> to vector<2x16xf32>
    %46 = arith.addf %44, %45 : vector<2x16xf32>
    %47 = arith.negf %46 : vector<2x16xf32>
    %48 = math.exp %47 : vector<2x16xf32>
    %cst_15 = arith.constant 1.000000e+00 : f32
    %49 = vector.broadcast %cst_15 : f32 to vector<2x16xf32>
    %50 = arith.addf %49, %48 : vector<2x16xf32>
    %51 = arith.divf %49, %50 : vector<2x16xf32>
    %52 = vector.extract_strided_slice %11 {offsets = [0, 16], sizes = [2, 16], strides = [1, 1]} : vector<2x48xf32> to vector<2x16xf32>
    %53 = vector.extract_strided_slice %43 {offsets = [0, 16], sizes = [2, 16], strides = [1, 1]} : vector<2x48xf32> to vector<2x16xf32>
    %54 = arith.addf %52, %53 : vector<2x16xf32>
    %55 = arith.negf %54 : vector<2x16xf32>
    %56 = math.exp %55 : vector<2x16xf32>
    %cst_16 = arith.constant 1.000000e+00 : f32
    %57 = vector.broadcast %cst_16 : f32 to vector<2x16xf32>
    %58 = arith.addf %57, %56 : vector<2x16xf32>
    %59 = arith.divf %57, %58 : vector<2x16xf32>
    %60 = vector.extract_strided_slice %11 {offsets = [0, 32], sizes = [2, 16], strides = [1, 1]} : vector<2x48xf32> to vector<2x16xf32>
    %61 = vector.extract_strided_slice %43 {offsets = [0, 32], sizes = [2, 16], strides = [1, 1]} : vector<2x48xf32> to vector<2x16xf32>
    %62 = arith.mulf %51, %61 : vector<2x16xf32>
    %63 = arith.addf %60, %62 : vector<2x16xf32>
    %64 = math.tanh %63 : vector<2x16xf32>
    %cst_17 = arith.constant 1.000000e+00 : f32
    %65 = vector.broadcast %cst_17 : f32 to vector<2x16xf32>
    %66 = arith.subf %65, %59 : vector<2x16xf32>
    %67 = arith.mulf %66, %64 : vector<2x16xf32>
    %68 = arith.mulf %59, %9 : vector<2x16xf32>
    %69 = arith.addf %67, %68 : vector<2x16xf32>
    %70 = vector.extract_strided_slice %5 {offsets = [2, 0], sizes = [2, 48], strides = [1, 1]} : vector<16x96xf32> to vector<2x48xf32>
    %71 = vector.extract_strided_slice %5 {offsets = [12, 48], sizes = [2, 48], strides = [1, 1]} : vector<16x96xf32> to vector<2x48xf32>
    %72 = tpu.concatenate %42, %69 in 1 : vector<2x16xf32>, vector<2x16xf32> -> vector<2x32xf32>
    %cst_18 = arith.constant dense<0.000000e+00> : vector<2x96xf32>
    %73 = tpu.matmul %72, %6, %cst_18 {dimension_numbers = #tpu.dot_dimension_numbers<[1], [0], [0], [1], [0, 0, 1, 1], [], []>} : vector<2x32xf32>, vector<32x96xf32>, vector<2x96xf32> -> vector<2x96xf32>
    %74 = vector.broadcast %7 : vector<1x96xf32> to vector<2x96xf32>
    %75 = arith.addf %73, %74 : vector<2x96xf32>
    %76 = vector.extract_strided_slice %75 {offsets = [0, 0], sizes = [2, 48], strides = [1, 1]} : vector<2x96xf32> to vector<2x48xf32>
    %77 = vector.extract_strided_slice %70 {offsets = [0, 0], sizes = [2, 16], strides = [1, 1]} : vector<2x48xf32> to vector<2x16xf32>
    %78 = vector.extract_strided_slice %76 {offsets = [0, 0], sizes = [2, 16], strides = [1, 1]} : vector<2x48xf32> to vector<2x16xf32>
    %79 = arith.addf %77, %78 : vector<2x16xf32>
    %80 = arith.negf %79 : vector<2x16xf32>
    %81 = math.exp %80 : vector<2x16xf32>
    %cst_19 = arith.constant 1.000000e+00 : f32
    %82 = vector.broadcast %cst_19 : f32 to vector<2x16xf32>
    %83 = arith.addf %82, %81 : vector<2x16xf32>
    %84 = arith.divf %82, %83 : vector<2x16xf32>
    %85 = vector.extract_strided_slice %70 {offsets = [0, 16], sizes = [2, 16], strides = [1, 1]} : vector<2x48xf32> to vector<2x16xf32>
    %86 = vector.extract_strided_slice %76 {offsets = [0, 16], sizes = [2, 16], strides = [1, 1]} : vector<2x48xf32> to vector<2x16xf32>
    %87 = arith.addf %85, %86 : vector<2x16xf32>
    %88 = arith.negf %87 : vector<2x16xf32>
    %89 = math.exp %88 : vector<2x16xf32>
    %cst_20 = arith.constant 1.000000e+00 : f32
    %90 = vector.broadcast %cst_20 : f32 to vector<2x16xf32>
    %91 = arith.addf %90, %89 : vector<2x16xf32>
    %92 = arith.divf %90, %91 : vector<2x16xf32>
    %93 = vector.extract_strided_slice %70 {offsets = [0, 32], sizes = [2, 16], strides = [1, 1]} : vector<2x48xf32> to vector<2x16xf32>
    %94 = vector.extract_strided_slice %76 {offsets = [0, 32], sizes = [2, 16], strides = [1, 1]} : vector<2x48xf32> to vector<2x16xf32>
    %95 = arith.mulf %84, %94 : vector<2x16xf32>
    %96 = arith.addf %93, %95 : vector<2x16xf32>
    %97 = math.tanh %96 : vector<2x16xf32>
    %cst_21 = arith.constant 1.000000e+00 : f32
    %98 = vector.broadcast %cst_21 : f32 to vector<2x16xf32>
    %99 = arith.subf %98, %92 : vector<2x16xf32>
    %100 = arith.mulf %99, %97 : vector<2x16xf32>
    %101 = arith.mulf %92, %42 : vector<2x16xf32>
    %102 = arith.addf %100, %101 : vector<2x16xf32>
    %103 = vector.extract_strided_slice %75 {offsets = [0, 48], sizes = [2, 48], strides = [1, 1]} : vector<2x96xf32> to vector<2x48xf32>
    %104 = vector.extract_strided_slice %71 {offsets = [0, 0], sizes = [2, 16], strides = [1, 1]} : vector<2x48xf32> to vector<2x16xf32>
    %105 = vector.extract_strided_slice %103 {offsets = [0, 0], sizes = [2, 16], strides = [1, 1]} : vector<2x48xf32> to vector<2x16xf32>
    %106 = arith.addf %104, %105 : vector<2x16xf32>
    %107 = arith.negf %106 : vector<2x16xf32>
    %108 = math.exp %107 : vector<2x16xf32>
    %cst_22 = arith.constant 1.000000e+00 : f32
    %109 = vector.broadcast %cst_22 : f32 to vector<2x16xf32>
    %110 = arith.addf %109, %108 : vector<2x16xf32>
    %111 = arith.divf %109, %110 : vector<2x16xf32>
    %112 = vector.extract_strided_slice %71 {offsets = [0, 16], sizes = [2, 16], strides = [1, 1]} : vector<2x48xf32> to vector<2x16xf32>
    %113 = vector.extract_strided_slice %103 {offsets = [0, 16], sizes = [2, 16], strides = [1, 1]} : vector<2x48xf32> to vector<2x16xf32>
    %114 = arith.addf %112, %113 : vector<2x16xf32>
    %115 = arith.negf %114 : vector<2x16xf32>
    %116 = math.exp %115 : vector<2x16xf32>
    %cst_23 = arith.constant 1.000000e+00 : f32
    %117 = vector.broadcast %cst_23 : f32 to vector<2x16xf32>
    %118 = arith.addf %117, %116 : vector<2x16xf32>
    %119 = arith.divf %117, %118 : vector<2x16xf32>
    %120 = vector.extract_strided_slice %71 {offsets = [0, 32], sizes = [2, 16], strides = [1, 1]} : vector<2x48xf32> to vector<2x16xf32>
    %121 = vector.extract_strided_slice %103 {offsets = [0, 32], sizes = [2, 16], strides = [1, 1]} : vector<2x48xf32> to vector<2x16xf32>
    %122 = arith.mulf %111, %121 : vector<2x16xf32>
    %123 = arith.addf %120, %122 : vector<2x16xf32>
    %124 = math.tanh %123 : vector<2x16xf32>
    %cst_24 = arith.constant 1.000000e+00 : f32
    %125 = vector.broadcast %cst_24 : f32 to vector<2x16xf32>
    %126 = arith.subf %125, %119 : vector<2x16xf32>
    %127 = arith.mulf %126, %124 : vector<2x16xf32>
    %128 = arith.mulf %119, %69 : vector<2x16xf32>
    %129 = arith.addf %127, %128 : vector<2x16xf32>
    %130 = vector.extract_strided_slice %5 {offsets = [4, 0], sizes = [2, 48], strides = [1, 1]} : vector<16x96xf32> to vector<2x48xf32>
    %131 = vector.extract_strided_slice %5 {offsets = [10, 48], sizes = [2, 48], strides = [1, 1]} : vector<16x96xf32> to vector<2x48xf32>
    %132 = tpu.concatenate %102, %129 in 1 : vector<2x16xf32>, vector<2x16xf32> -> vector<2x32xf32>
    %cst_25 = arith.constant dense<0.000000e+00> : vector<2x96xf32>
    %133 = tpu.matmul %132, %6, %cst_25 {dimension_numbers = #tpu.dot_dimension_numbers<[1], [0], [0], [1], [0, 0, 1, 1], [], []>} : vector<2x32xf32>, vector<32x96xf32>, vector<2x96xf32> -> vector<2x96xf32>
    %134 = vector.broadcast %7 : vector<1x96xf32> to vector<2x96xf32>
    %135 = arith.addf %133, %134 : vector<2x96xf32>
    %136 = vector.extract_strided_slice %135 {offsets = [0, 0], sizes = [2, 48], strides = [1, 1]} : vector<2x96xf32> to vector<2x48xf32>
    %137 = vector.extract_strided_slice %130 {offsets = [0, 0], sizes = [2, 16], strides = [1, 1]} : vector<2x48xf32> to vector<2x16xf32>
    %138 = vector.extract_strided_slice %136 {offsets = [0, 0], sizes = [2, 16], strides = [1, 1]} : vector<2x48xf32> to vector<2x16xf32>
    %139 = arith.addf %137, %138 : vector<2x16xf32>
    %140 = arith.negf %139 : vector<2x16xf32>
    %141 = math.exp %140 : vector<2x16xf32>
    %cst_26 = arith.constant 1.000000e+00 : f32
    %142 = vector.broadcast %cst_26 : f32 to vector<2x16xf32>
    %143 = arith.addf %142, %141 : vector<2x16xf32>
    %144 = arith.divf %142, %143 : vector<2x16xf32>
    %145 = vector.extract_strided_slice %130 {offsets = [0, 16], sizes = [2, 16], strides = [1, 1]} : vector<2x48xf32> to vector<2x16xf32>
    %146 = vector.extract_strided_slice %136 {offsets = [0, 16], sizes = [2, 16], strides = [1, 1]} : vector<2x48xf32> to vector<2x16xf32>
    %147 = arith.addf %145, %146 : vector<2x16xf32>
    %148 = arith.negf %147 : vector<2x16xf32>
    %149 = math.exp %148 : vector<2x16xf32>
    %cst_27 = arith.constant 1.000000e+00 : f32
    %150 = vector.broadcast %cst_27 : f32 to vector<2x16xf32>
    %151 = arith.addf %150, %149 : vector<2x16xf32>
    %152 = arith.divf %150, %151 : vector<2x16xf32>
    %153 = vector.extract_strided_slice %130 {offsets = [0, 32], sizes = [2, 16], strides = [1, 1]} : vector<2x48xf32> to vector<2x16xf32>
    %154 = vector.extract_strided_slice %136 {offsets = [0, 32], sizes = [2, 16], strides = [1, 1]} : vector<2x48xf32> to vector<2x16xf32>
    %155 = arith.mulf %144, %154 : vector<2x16xf32>
    %156 = arith.addf %153, %155 : vector<2x16xf32>
    %157 = math.tanh %156 : vector<2x16xf32>
    %cst_28 = arith.constant 1.000000e+00 : f32
    %158 = vector.broadcast %cst_28 : f32 to vector<2x16xf32>
    %159 = arith.subf %158, %152 : vector<2x16xf32>
    %160 = arith.mulf %159, %157 : vector<2x16xf32>
    %161 = arith.mulf %152, %102 : vector<2x16xf32>
    %162 = arith.addf %160, %161 : vector<2x16xf32>
    %163 = vector.extract_strided_slice %135 {offsets = [0, 48], sizes = [2, 48], strides = [1, 1]} : vector<2x96xf32> to vector<2x48xf32>
    %164 = vector.extract_strided_slice %131 {offsets = [0, 0], sizes = [2, 16], strides = [1, 1]} : vector<2x48xf32> to vector<2x16xf32>
    %165 = vector.extract_strided_slice %163 {offsets = [0, 0], sizes = [2, 16], strides = [1, 1]} : vector<2x48xf32> to vector<2x16xf32>
    %166 = arith.addf %164, %165 : vector<2x16xf32>
    %167 = arith.negf %166 : vector<2x16xf32>
    %168 = math.exp %167 : vector<2x16xf32>
    %cst_29 = arith.constant 1.000000e+00 : f32
    %169 = vector.broadcast %cst_29 : f32 to vector<2x16xf32>
    %170 = arith.addf %169, %168 : vector<2x16xf32>
    %171 = arith.divf %169, %170 : vector<2x16xf32>
    %172 = vector.extract_strided_slice %131 {offsets = [0, 16], sizes = [2, 16], strides = [1, 1]} : vector<2x48xf32> to vector<2x16xf32>
    %173 = vector.extract_strided_slice %163 {offsets = [0, 16], sizes = [2, 16], strides = [1, 1]} : vector<2x48xf32> to vector<2x16xf32>
    %174 = arith.addf %172, %173 : vector<2x16xf32>
    %175 = arith.negf %174 : vector<2x16xf32>
    %176 = math.exp %175 : vector<2x16xf32>
    %cst_30 = arith.constant 1.000000e+00 : f32
    %177 = vector.broadcast %cst_30 : f32 to vector<2x16xf32>
    %178 = arith.addf %177, %176 : vector<2x16xf32>
    %179 = arith.divf %177, %178 : vector<2x16xf32>
    %180 = vector.extract_strided_slice %131 {offsets = [0, 32], sizes = [2, 16], strides = [1, 1]} : vector<2x48xf32> to vector<2x16xf32>
    %181 = vector.extract_strided_slice %163 {offsets = [0, 32], sizes = [2, 16], strides = [1, 1]} : vector<2x48xf32> to vector<2x16xf32>
    %182 = arith.mulf %171, %181 : vector<2x16xf32>
    %183 = arith.addf %180, %182 : vector<2x16xf32>
    %184 = math.tanh %183 : vector<2x16xf32>
    %cst_31 = arith.constant 1.000000e+00 : f32
    %185 = vector.broadcast %cst_31 : f32 to vector<2x16xf32>
    %186 = arith.subf %185, %179 : vector<2x16xf32>
    %187 = arith.mulf %186, %184 : vector<2x16xf32>
    %188 = arith.mulf %179, %129 : vector<2x16xf32>
    %189 = arith.addf %187, %188 : vector<2x16xf32>
    %190 = vector.extract_strided_slice %5 {offsets = [6, 0], sizes = [2, 48], strides = [1, 1]} : vector<16x96xf32> to vector<2x48xf32>
    %191 = vector.extract_strided_slice %5 {offsets = [8, 48], sizes = [2, 48], strides = [1, 1]} : vector<16x96xf32> to vector<2x48xf32>
    %192 = tpu.concatenate %162, %189 in 1 : vector<2x16xf32>, vector<2x16xf32> -> vector<2x32xf32>
    %cst_32 = arith.constant dense<0.000000e+00> : vector<2x96xf32>
    %193 = tpu.matmul %192, %6, %cst_32 {dimension_numbers = #tpu.dot_dimension_numbers<[1], [0], [0], [1], [0, 0, 1, 1], [], []>} : vector<2x32xf32>, vector<32x96xf32>, vector<2x96xf32> -> vector<2x96xf32>
    %194 = vector.broadcast %7 : vector<1x96xf32> to vector<2x96xf32>
    %195 = arith.addf %193, %194 : vector<2x96xf32>
    %196 = vector.extract_strided_slice %195 {offsets = [0, 0], sizes = [2, 48], strides = [1, 1]} : vector<2x96xf32> to vector<2x48xf32>
    %197 = vector.extract_strided_slice %190 {offsets = [0, 0], sizes = [2, 16], strides = [1, 1]} : vector<2x48xf32> to vector<2x16xf32>
    %198 = vector.extract_strided_slice %196 {offsets = [0, 0], sizes = [2, 16], strides = [1, 1]} : vector<2x48xf32> to vector<2x16xf32>
    %199 = arith.addf %197, %198 : vector<2x16xf32>
    %200 = arith.negf %199 : vector<2x16xf32>
    %201 = math.exp %200 : vector<2x16xf32>
    %cst_33 = arith.constant 1.000000e+00 : f32
    %202 = vector.broadcast %cst_33 : f32 to vector<2x16xf32>
    %203 = arith.addf %202, %201 : vector<2x16xf32>
    %204 = arith.divf %202, %203 : vector<2x16xf32>
    %205 = vector.extract_strided_slice %190 {offsets = [0, 16], sizes = [2, 16], strides = [1, 1]} : vector<2x48xf32> to vector<2x16xf32>
    %206 = vector.extract_strided_slice %196 {offsets = [0, 16], sizes = [2, 16], strides = [1, 1]} : vector<2x48xf32> to vector<2x16xf32>
    %207 = arith.addf %205, %206 : vector<2x16xf32>
    %208 = arith.negf %207 : vector<2x16xf32>
    %209 = math.exp %208 : vector<2x16xf32>
    %cst_34 = arith.constant 1.000000e+00 : f32
    %210 = vector.broadcast %cst_34 : f32 to vector<2x16xf32>
    %211 = arith.addf %210, %209 : vector<2x16xf32>
    %212 = arith.divf %210, %211 : vector<2x16xf32>
    %213 = vector.extract_strided_slice %190 {offsets = [0, 32], sizes = [2, 16], strides = [1, 1]} : vector<2x48xf32> to vector<2x16xf32>
    %214 = vector.extract_strided_slice %196 {offsets = [0, 32], sizes = [2, 16], strides = [1, 1]} : vector<2x48xf32> to vector<2x16xf32>
    %215 = arith.mulf %204, %214 : vector<2x16xf32>
    %216 = arith.addf %213, %215 : vector<2x16xf32>
    %217 = math.tanh %216 : vector<2x16xf32>
    %cst_35 = arith.constant 1.000000e+00 : f32
    %218 = vector.broadcast %cst_35 : f32 to vector<2x16xf32>
    %219 = arith.subf %218, %212 : vector<2x16xf32>
    %220 = arith.mulf %219, %217 : vector<2x16xf32>
    %221 = arith.mulf %212, %162 : vector<2x16xf32>
    %222 = arith.addf %220, %221 : vector<2x16xf32>
    %223 = vector.extract_strided_slice %195 {offsets = [0, 48], sizes = [2, 48], strides = [1, 1]} : vector<2x96xf32> to vector<2x48xf32>
    %224 = vector.extract_strided_slice %191 {offsets = [0, 0], sizes = [2, 16], strides = [1, 1]} : vector<2x48xf32> to vector<2x16xf32>
    %225 = vector.extract_strided_slice %223 {offsets = [0, 0], sizes = [2, 16], strides = [1, 1]} : vector<2x48xf32> to vector<2x16xf32>
    %226 = arith.addf %224, %225 : vector<2x16xf32>
    %227 = arith.negf %226 : vector<2x16xf32>
    %228 = math.exp %227 : vector<2x16xf32>
    %cst_36 = arith.constant 1.000000e+00 : f32
    %229 = vector.broadcast %cst_36 : f32 to vector<2x16xf32>
    %230 = arith.addf %229, %228 : vector<2x16xf32>
    %231 = arith.divf %229, %230 : vector<2x16xf32>
    %232 = vector.extract_strided_slice %191 {offsets = [0, 16], sizes = [2, 16], strides = [1, 1]} : vector<2x48xf32> to vector<2x16xf32>
    %233 = vector.extract_strided_slice %223 {offsets = [0, 16], sizes = [2, 16], strides = [1, 1]} : vector<2x48xf32> to vector<2x16xf32>
    %234 = arith.addf %232, %233 : vector<2x16xf32>
    %235 = arith.negf %234 : vector<2x16xf32>
    %236 = math.exp %235 : vector<2x16xf32>
    %cst_37 = arith.constant 1.000000e+00 : f32
    %237 = vector.broadcast %cst_37 : f32 to vector<2x16xf32>
    %238 = arith.addf %237, %236 : vector<2x16xf32>
    %239 = arith.divf %237, %238 : vector<2x16xf32>
    %240 = vector.extract_strided_slice %191 {offsets = [0, 32], sizes = [2, 16], strides = [1, 1]} : vector<2x48xf32> to vector<2x16xf32>
    %241 = vector.extract_strided_slice %223 {offsets = [0, 32], sizes = [2, 16], strides = [1, 1]} : vector<2x48xf32> to vector<2x16xf32>
    %242 = arith.mulf %231, %241 : vector<2x16xf32>
    %243 = arith.addf %240, %242 : vector<2x16xf32>
    %244 = math.tanh %243 : vector<2x16xf32>
    %cst_38 = arith.constant 1.000000e+00 : f32
    %245 = vector.broadcast %cst_38 : f32 to vector<2x16xf32>
    %246 = arith.subf %245, %239 : vector<2x16xf32>
    %247 = arith.mulf %246, %244 : vector<2x16xf32>
    %248 = arith.mulf %239, %189 : vector<2x16xf32>
    %249 = arith.addf %247, %248 : vector<2x16xf32>
    %250 = vector.extract_strided_slice %5 {offsets = [8, 0], sizes = [2, 48], strides = [1, 1]} : vector<16x96xf32> to vector<2x48xf32>
    %251 = vector.extract_strided_slice %5 {offsets = [6, 48], sizes = [2, 48], strides = [1, 1]} : vector<16x96xf32> to vector<2x48xf32>
    %252 = tpu.concatenate %222, %249 in 1 : vector<2x16xf32>, vector<2x16xf32> -> vector<2x32xf32>
    %cst_39 = arith.constant dense<0.000000e+00> : vector<2x96xf32>
    %253 = tpu.matmul %252, %6, %cst_39 {dimension_numbers = #tpu.dot_dimension_numbers<[1], [0], [0], [1], [0, 0, 1, 1], [], []>} : vector<2x32xf32>, vector<32x96xf32>, vector<2x96xf32> -> vector<2x96xf32>
    %254 = vector.broadcast %7 : vector<1x96xf32> to vector<2x96xf32>
    %255 = arith.addf %253, %254 : vector<2x96xf32>
    %256 = vector.extract_strided_slice %255 {offsets = [0, 0], sizes = [2, 48], strides = [1, 1]} : vector<2x96xf32> to vector<2x48xf32>
    %257 = vector.extract_strided_slice %250 {offsets = [0, 0], sizes = [2, 16], strides = [1, 1]} : vector<2x48xf32> to vector<2x16xf32>
    %258 = vector.extract_strided_slice %256 {offsets = [0, 0], sizes = [2, 16], strides = [1, 1]} : vector<2x48xf32> to vector<2x16xf32>
    %259 = arith.addf %257, %258 : vector<2x16xf32>
    %260 = arith.negf %259 : vector<2x16xf32>
    %261 = math.exp %260 : vector<2x16xf32>
    %cst_40 = arith.constant 1.000000e+00 : f32
    %262 = vector.broadcast %cst_40 : f32 to vector<2x16xf32>
    %263 = arith.addf %262, %261 : vector<2x16xf32>
    %264 = arith.divf %262, %263 : vector<2x16xf32>
    %265 = vector.extract_strided_slice %250 {offsets = [0, 16], sizes = [2, 16], strides = [1, 1]} : vector<2x48xf32> to vector<2x16xf32>
    %266 = vector.extract_strided_slice %256 {offsets = [0, 16], sizes = [2, 16], strides = [1, 1]} : vector<2x48xf32> to vector<2x16xf32>
    %267 = arith.addf %265, %266 : vector<2x16xf32>
    %268 = arith.negf %267 : vector<2x16xf32>
    %269 = math.exp %268 : vector<2x16xf32>
    %cst_41 = arith.constant 1.000000e+00 : f32
    %270 = vector.broadcast %cst_41 : f32 to vector<2x16xf32>
    %271 = arith.addf %270, %269 : vector<2x16xf32>
    %272 = arith.divf %270, %271 : vector<2x16xf32>
    %273 = vector.extract_strided_slice %250 {offsets = [0, 32], sizes = [2, 16], strides = [1, 1]} : vector<2x48xf32> to vector<2x16xf32>
    %274 = vector.extract_strided_slice %256 {offsets = [0, 32], sizes = [2, 16], strides = [1, 1]} : vector<2x48xf32> to vector<2x16xf32>
    %275 = arith.mulf %264, %274 : vector<2x16xf32>
    %276 = arith.addf %273, %275 : vector<2x16xf32>
    %277 = math.tanh %276 : vector<2x16xf32>
    %cst_42 = arith.constant 1.000000e+00 : f32
    %278 = vector.broadcast %cst_42 : f32 to vector<2x16xf32>
    %279 = arith.subf %278, %272 : vector<2x16xf32>
    %280 = arith.mulf %279, %277 : vector<2x16xf32>
    %281 = arith.mulf %272, %222 : vector<2x16xf32>
    %282 = arith.addf %280, %281 : vector<2x16xf32>
    %283 = vector.extract_strided_slice %255 {offsets = [0, 48], sizes = [2, 48], strides = [1, 1]} : vector<2x96xf32> to vector<2x48xf32>
    %284 = vector.extract_strided_slice %251 {offsets = [0, 0], sizes = [2, 16], strides = [1, 1]} : vector<2x48xf32> to vector<2x16xf32>
    %285 = vector.extract_strided_slice %283 {offsets = [0, 0], sizes = [2, 16], strides = [1, 1]} : vector<2x48xf32> to vector<2x16xf32>
    %286 = arith.addf %284, %285 : vector<2x16xf32>
    %287 = arith.negf %286 : vector<2x16xf32>
    %288 = math.exp %287 : vector<2x16xf32>
    %cst_43 = arith.constant 1.000000e+00 : f32
    %289 = vector.broadcast %cst_43 : f32 to vector<2x16xf32>
    %290 = arith.addf %289, %288 : vector<2x16xf32>
    %291 = arith.divf %289, %290 : vector<2x16xf32>
    %292 = vector.extract_strided_slice %251 {offsets = [0, 16], sizes = [2, 16], strides = [1, 1]} : vector<2x48xf32> to vector<2x16xf32>
    %293 = vector.extract_strided_slice %283 {offsets = [0, 16], sizes = [2, 16], strides = [1, 1]} : vector<2x48xf32> to vector<2x16xf32>
    %294 = arith.addf %292, %293 : vector<2x16xf32>
    %295 = arith.negf %294 : vector<2x16xf32>
    %296 = math.exp %295 : vector<2x16xf32>
    %cst_44 = arith.constant 1.000000e+00 : f32
    %297 = vector.broadcast %cst_44 : f32 to vector<2x16xf32>
    %298 = arith.addf %297, %296 : vector<2x16xf32>
    %299 = arith.divf %297, %298 : vector<2x16xf32>
    %300 = vector.extract_strided_slice %251 {offsets = [0, 32], sizes = [2, 16], strides = [1, 1]} : vector<2x48xf32> to vector<2x16xf32>
    %301 = vector.extract_strided_slice %283 {offsets = [0, 32], sizes = [2, 16], strides = [1, 1]} : vector<2x48xf32> to vector<2x16xf32>
    %302 = arith.mulf %291, %301 : vector<2x16xf32>
    %303 = arith.addf %300, %302 : vector<2x16xf32>
    %304 = math.tanh %303 : vector<2x16xf32>
    %cst_45 = arith.constant 1.000000e+00 : f32
    %305 = vector.broadcast %cst_45 : f32 to vector<2x16xf32>
    %306 = arith.subf %305, %299 : vector<2x16xf32>
    %307 = arith.mulf %306, %304 : vector<2x16xf32>
    %308 = arith.mulf %299, %249 : vector<2x16xf32>
    %309 = arith.addf %307, %308 : vector<2x16xf32>
    %310 = vector.extract_strided_slice %5 {offsets = [10, 0], sizes = [2, 48], strides = [1, 1]} : vector<16x96xf32> to vector<2x48xf32>
    %311 = vector.extract_strided_slice %5 {offsets = [4, 48], sizes = [2, 48], strides = [1, 1]} : vector<16x96xf32> to vector<2x48xf32>
    %312 = tpu.concatenate %282, %309 in 1 : vector<2x16xf32>, vector<2x16xf32> -> vector<2x32xf32>
    %cst_46 = arith.constant dense<0.000000e+00> : vector<2x96xf32>
    %313 = tpu.matmul %312, %6, %cst_46 {dimension_numbers = #tpu.dot_dimension_numbers<[1], [0], [0], [1], [0, 0, 1, 1], [], []>} : vector<2x32xf32>, vector<32x96xf32>, vector<2x96xf32> -> vector<2x96xf32>
    %314 = vector.broadcast %7 : vector<1x96xf32> to vector<2x96xf32>
    %315 = arith.addf %313, %314 : vector<2x96xf32>
    %316 = vector.extract_strided_slice %315 {offsets = [0, 0], sizes = [2, 48], strides = [1, 1]} : vector<2x96xf32> to vector<2x48xf32>
    %317 = vector.extract_strided_slice %310 {offsets = [0, 0], sizes = [2, 16], strides = [1, 1]} : vector<2x48xf32> to vector<2x16xf32>
    %318 = vector.extract_strided_slice %316 {offsets = [0, 0], sizes = [2, 16], strides = [1, 1]} : vector<2x48xf32> to vector<2x16xf32>
    %319 = arith.addf %317, %318 : vector<2x16xf32>
    %320 = arith.negf %319 : vector<2x16xf32>
    %321 = math.exp %320 : vector<2x16xf32>
    %cst_47 = arith.constant 1.000000e+00 : f32
    %322 = vector.broadcast %cst_47 : f32 to vector<2x16xf32>
    %323 = arith.addf %322, %321 : vector<2x16xf32>
    %324 = arith.divf %322, %323 : vector<2x16xf32>
    %325 = vector.extract_strided_slice %310 {offsets = [0, 16], sizes = [2, 16], strides = [1, 1]} : vector<2x48xf32> to vector<2x16xf32>
    %326 = vector.extract_strided_slice %316 {offsets = [0, 16], sizes = [2, 16], strides = [1, 1]} : vector<2x48xf32> to vector<2x16xf32>
    %327 = arith.addf %325, %326 : vector<2x16xf32>
    %328 = arith.negf %327 : vector<2x16xf32>
    %329 = math.exp %328 : vector<2x16xf32>
    %cst_48 = arith.constant 1.000000e+00 : f32
    %330 = vector.broadcast %cst_48 : f32 to vector<2x16xf32>
    %331 = arith.addf %330, %329 : vector<2x16xf32>
    %332 = arith.divf %330, %331 : vector<2x16xf32>
    %333 = vector.extract_strided_slice %310 {offsets = [0, 32], sizes = [2, 16], strides = [1, 1]} : vector<2x48xf32> to vector<2x16xf32>
    %334 = vector.extract_strided_slice %316 {offsets = [0, 32], sizes = [2, 16], strides = [1, 1]} : vector<2x48xf32> to vector<2x16xf32>
    %335 = arith.mulf %324, %334 : vector<2x16xf32>
    %336 = arith.addf %333, %335 : vector<2x16xf32>
    %337 = math.tanh %336 : vector<2x16xf32>
    %cst_49 = arith.constant 1.000000e+00 : f32
    %338 = vector.broadcast %cst_49 : f32 to vector<2x16xf32>
    %339 = arith.subf %338, %332 : vector<2x16xf32>
    %340 = arith.mulf %339, %337 : vector<2x16xf32>
    %341 = arith.mulf %332, %282 : vector<2x16xf32>
    %342 = arith.addf %340, %341 : vector<2x16xf32>
    %343 = vector.extract_strided_slice %315 {offsets = [0, 48], sizes = [2, 48], strides = [1, 1]} : vector<2x96xf32> to vector<2x48xf32>
    %344 = vector.extract_strided_slice %311 {offsets = [0, 0], sizes = [2, 16], strides = [1, 1]} : vector<2x48xf32> to vector<2x16xf32>
    %345 = vector.extract_strided_slice %343 {offsets = [0, 0], sizes = [2, 16], strides = [1, 1]} : vector<2x48xf32> to vector<2x16xf32>
    %346 = arith.addf %344, %345 : vector<2x16xf32>
    %347 = arith.negf %346 : vector<2x16xf32>
    %348 = math.exp %347 : vector<2x16xf32>
    %cst_50 = arith.constant 1.000000e+00 : f32
    %349 = vector.broadcast %cst_50 : f32 to vector<2x16xf32>
    %350 = arith.addf %349, %348 : vector<2x16xf32>
    %351 = arith.divf %349, %350 : vector<2x16xf32>
    %352 = vector.extract_strided_slice %311 {offsets = [0, 16], sizes = [2, 16], strides = [1, 1]} : vector<2x48xf32> to vector<2x16xf32>
    %353 = vector.extract_strided_slice %343 {offsets = [0, 16], sizes = [2, 16], strides = [1, 1]} : vector<2x48xf32> to vector<2x16xf32>
    %354 = arith.addf %352, %353 : vector<2x16xf32>
    %355 = arith.negf %354 : vector<2x16xf32>
    %356 = math.exp %355 : vector<2x16xf32>
    %cst_51 = arith.constant 1.000000e+00 : f32
    %357 = vector.broadcast %cst_51 : f32 to vector<2x16xf32>
    %358 = arith.addf %357, %356 : vector<2x16xf32>
    %359 = arith.divf %357, %358 : vector<2x16xf32>
    %360 = vector.extract_strided_slice %311 {offsets = [0, 32], sizes = [2, 16], strides = [1, 1]} : vector<2x48xf32> to vector<2x16xf32>
    %361 = vector.extract_strided_slice %343 {offsets = [0, 32], sizes = [2, 16], strides = [1, 1]} : vector<2x48xf32> to vector<2x16xf32>
    %362 = arith.mulf %351, %361 : vector<2x16xf32>
    %363 = arith.addf %360, %362 : vector<2x16xf32>
    %364 = math.tanh %363 : vector<2x16xf32>
    %cst_52 = arith.constant 1.000000e+00 : f32
    %365 = vector.broadcast %cst_52 : f32 to vector<2x16xf32>
    %366 = arith.subf %365, %359 : vector<2x16xf32>
    %367 = arith.mulf %366, %364 : vector<2x16xf32>
    %368 = arith.mulf %359, %309 : vector<2x16xf32>
    %369 = arith.addf %367, %368 : vector<2x16xf32>
    %370 = vector.extract_strided_slice %5 {offsets = [12, 0], sizes = [2, 48], strides = [1, 1]} : vector<16x96xf32> to vector<2x48xf32>
    %371 = vector.extract_strided_slice %5 {offsets = [2, 48], sizes = [2, 48], strides = [1, 1]} : vector<16x96xf32> to vector<2x48xf32>
    %372 = tpu.concatenate %342, %369 in 1 : vector<2x16xf32>, vector<2x16xf32> -> vector<2x32xf32>
    %cst_53 = arith.constant dense<0.000000e+00> : vector<2x96xf32>
    %373 = tpu.matmul %372, %6, %cst_53 {dimension_numbers = #tpu.dot_dimension_numbers<[1], [0], [0], [1], [0, 0, 1, 1], [], []>} : vector<2x32xf32>, vector<32x96xf32>, vector<2x96xf32> -> vector<2x96xf32>
    %374 = vector.broadcast %7 : vector<1x96xf32> to vector<2x96xf32>
    %375 = arith.addf %373, %374 : vector<2x96xf32>
    %376 = vector.extract_strided_slice %375 {offsets = [0, 0], sizes = [2, 48], strides = [1, 1]} : vector<2x96xf32> to vector<2x48xf32>
    %377 = vector.extract_strided_slice %370 {offsets = [0, 0], sizes = [2, 16], strides = [1, 1]} : vector<2x48xf32> to vector<2x16xf32>
    %378 = vector.extract_strided_slice %376 {offsets = [0, 0], sizes = [2, 16], strides = [1, 1]} : vector<2x48xf32> to vector<2x16xf32>
    %379 = arith.addf %377, %378 : vector<2x16xf32>
    %380 = arith.negf %379 : vector<2x16xf32>
    %381 = math.exp %380 : vector<2x16xf32>
    %cst_54 = arith.constant 1.000000e+00 : f32
    %382 = vector.broadcast %cst_54 : f32 to vector<2x16xf32>
    %383 = arith.addf %382, %381 : vector<2x16xf32>
    %384 = arith.divf %382, %383 : vector<2x16xf32>
    %385 = vector.extract_strided_slice %370 {offsets = [0, 16], sizes = [2, 16], strides = [1, 1]} : vector<2x48xf32> to vector<2x16xf32>
    %386 = vector.extract_strided_slice %376 {offsets = [0, 16], sizes = [2, 16], strides = [1, 1]} : vector<2x48xf32> to vector<2x16xf32>
    %387 = arith.addf %385, %386 : vector<2x16xf32>
    %388 = arith.negf %387 : vector<2x16xf32>
    %389 = math.exp %388 : vector<2x16xf32>
    %cst_55 = arith.constant 1.000000e+00 : f32
    %390 = vector.broadcast %cst_55 : f32 to vector<2x16xf32>
    %391 = arith.addf %390, %389 : vector<2x16xf32>
    %392 = arith.divf %390, %391 : vector<2x16xf32>
    %393 = vector.extract_strided_slice %370 {offsets = [0, 32], sizes = [2, 16], strides = [1, 1]} : vector<2x48xf32> to vector<2x16xf32>
    %394 = vector.extract_strided_slice %376 {offsets = [0, 32], sizes = [2, 16], strides = [1, 1]} : vector<2x48xf32> to vector<2x16xf32>
    %395 = arith.mulf %384, %394 : vector<2x16xf32>
    %396 = arith.addf %393, %395 : vector<2x16xf32>
    %397 = math.tanh %396 : vector<2x16xf32>
    %cst_56 = arith.constant 1.000000e+00 : f32
    %398 = vector.broadcast %cst_56 : f32 to vector<2x16xf32>
    %399 = arith.subf %398, %392 : vector<2x16xf32>
    %400 = arith.mulf %399, %397 : vector<2x16xf32>
    %401 = arith.mulf %392, %342 : vector<2x16xf32>
    %402 = arith.addf %400, %401 : vector<2x16xf32>
    %403 = vector.extract_strided_slice %375 {offsets = [0, 48], sizes = [2, 48], strides = [1, 1]} : vector<2x96xf32> to vector<2x48xf32>
    %404 = vector.extract_strided_slice %371 {offsets = [0, 0], sizes = [2, 16], strides = [1, 1]} : vector<2x48xf32> to vector<2x16xf32>
    %405 = vector.extract_strided_slice %403 {offsets = [0, 0], sizes = [2, 16], strides = [1, 1]} : vector<2x48xf32> to vector<2x16xf32>
    %406 = arith.addf %404, %405 : vector<2x16xf32>
    %407 = arith.negf %406 : vector<2x16xf32>
    %408 = math.exp %407 : vector<2x16xf32>
    %cst_57 = arith.constant 1.000000e+00 : f32
    %409 = vector.broadcast %cst_57 : f32 to vector<2x16xf32>
    %410 = arith.addf %409, %408 : vector<2x16xf32>
    %411 = arith.divf %409, %410 : vector<2x16xf32>
    %412 = vector.extract_strided_slice %371 {offsets = [0, 16], sizes = [2, 16], strides = [1, 1]} : vector<2x48xf32> to vector<2x16xf32>
    %413 = vector.extract_strided_slice %403 {offsets = [0, 16], sizes = [2, 16], strides = [1, 1]} : vector<2x48xf32> to vector<2x16xf32>
    %414 = arith.addf %412, %413 : vector<2x16xf32>
    %415 = arith.negf %414 : vector<2x16xf32>
    %416 = math.exp %415 : vector<2x16xf32>
    %cst_58 = arith.constant 1.000000e+00 : f32
    %417 = vector.broadcast %cst_58 : f32 to vector<2x16xf32>
    %418 = arith.addf %417, %416 : vector<2x16xf32>
    %419 = arith.divf %417, %418 : vector<2x16xf32>
    %420 = vector.extract_strided_slice %371 {offsets = [0, 32], sizes = [2, 16], strides = [1, 1]} : vector<2x48xf32> to vector<2x16xf32>
    %421 = vector.extract_strided_slice %403 {offsets = [0, 32], sizes = [2, 16], strides = [1, 1]} : vector<2x48xf32> to vector<2x16xf32>
    %422 = arith.mulf %411, %421 : vector<2x16xf32>
    %423 = arith.addf %420, %422 : vector<2x16xf32>
    %424 = math.tanh %423 : vector<2x16xf32>
    %cst_59 = arith.constant 1.000000e+00 : f32
    %425 = vector.broadcast %cst_59 : f32 to vector<2x16xf32>
    %426 = arith.subf %425, %419 : vector<2x16xf32>
    %427 = arith.mulf %426, %424 : vector<2x16xf32>
    %428 = arith.mulf %419, %369 : vector<2x16xf32>
    %429 = arith.addf %427, %428 : vector<2x16xf32>
    %430 = vector.extract_strided_slice %5 {offsets = [14, 0], sizes = [2, 48], strides = [1, 1]} : vector<16x96xf32> to vector<2x48xf32>
    %431 = vector.extract_strided_slice %5 {offsets = [0, 48], sizes = [2, 48], strides = [1, 1]} : vector<16x96xf32> to vector<2x48xf32>
    %432 = tpu.concatenate %402, %429 in 1 : vector<2x16xf32>, vector<2x16xf32> -> vector<2x32xf32>
    %cst_60 = arith.constant dense<0.000000e+00> : vector<2x96xf32>
    %433 = tpu.matmul %432, %6, %cst_60 {dimension_numbers = #tpu.dot_dimension_numbers<[1], [0], [0], [1], [0, 0, 1, 1], [], []>} : vector<2x32xf32>, vector<32x96xf32>, vector<2x96xf32> -> vector<2x96xf32>
    %434 = vector.broadcast %7 : vector<1x96xf32> to vector<2x96xf32>
    %435 = arith.addf %433, %434 : vector<2x96xf32>
    %436 = vector.extract_strided_slice %435 {offsets = [0, 0], sizes = [2, 48], strides = [1, 1]} : vector<2x96xf32> to vector<2x48xf32>
    %437 = vector.extract_strided_slice %430 {offsets = [0, 0], sizes = [2, 16], strides = [1, 1]} : vector<2x48xf32> to vector<2x16xf32>
    %438 = vector.extract_strided_slice %436 {offsets = [0, 0], sizes = [2, 16], strides = [1, 1]} : vector<2x48xf32> to vector<2x16xf32>
    %439 = arith.addf %437, %438 : vector<2x16xf32>
    %440 = arith.negf %439 : vector<2x16xf32>
    %441 = math.exp %440 : vector<2x16xf32>
    %cst_61 = arith.constant 1.000000e+00 : f32
    %442 = vector.broadcast %cst_61 : f32 to vector<2x16xf32>
    %443 = arith.addf %442, %441 : vector<2x16xf32>
    %444 = arith.divf %442, %443 : vector<2x16xf32>
    %445 = vector.extract_strided_slice %430 {offsets = [0, 16], sizes = [2, 16], strides = [1, 1]} : vector<2x48xf32> to vector<2x16xf32>
    %446 = vector.extract_strided_slice %436 {offsets = [0, 16], sizes = [2, 16], strides = [1, 1]} : vector<2x48xf32> to vector<2x16xf32>
    %447 = arith.addf %445, %446 : vector<2x16xf32>
    %448 = arith.negf %447 : vector<2x16xf32>
    %449 = math.exp %448 : vector<2x16xf32>
    %cst_62 = arith.constant 1.000000e+00 : f32
    %450 = vector.broadcast %cst_62 : f32 to vector<2x16xf32>
    %451 = arith.addf %450, %449 : vector<2x16xf32>
    %452 = arith.divf %450, %451 : vector<2x16xf32>
    %453 = vector.extract_strided_slice %430 {offsets = [0, 32], sizes = [2, 16], strides = [1, 1]} : vector<2x48xf32> to vector<2x16xf32>
    %454 = vector.extract_strided_slice %436 {offsets = [0, 32], sizes = [2, 16], strides = [1, 1]} : vector<2x48xf32> to vector<2x16xf32>
    %455 = arith.mulf %444, %454 : vector<2x16xf32>
    %456 = arith.addf %453, %455 : vector<2x16xf32>
    %457 = math.tanh %456 : vector<2x16xf32>
    %cst_63 = arith.constant 1.000000e+00 : f32
    %458 = vector.broadcast %cst_63 : f32 to vector<2x16xf32>
    %459 = arith.subf %458, %452 : vector<2x16xf32>
    %460 = arith.mulf %459, %457 : vector<2x16xf32>
    %461 = arith.mulf %452, %402 : vector<2x16xf32>
    %462 = arith.addf %460, %461 : vector<2x16xf32>
    %463 = vector.extract_strided_slice %435 {offsets = [0, 48], sizes = [2, 48], strides = [1, 1]} : vector<2x96xf32> to vector<2x48xf32>
    %464 = vector.extract_strided_slice %431 {offsets = [0, 0], sizes = [2, 16], strides = [1, 1]} : vector<2x48xf32> to vector<2x16xf32>
    %465 = vector.extract_strided_slice %463 {offsets = [0, 0], sizes = [2, 16], strides = [1, 1]} : vector<2x48xf32> to vector<2x16xf32>
    %466 = arith.addf %464, %465 : vector<2x16xf32>
    %467 = arith.negf %466 : vector<2x16xf32>
    %468 = math.exp %467 : vector<2x16xf32>
    %cst_64 = arith.constant 1.000000e+00 : f32
    %469 = vector.broadcast %cst_64 : f32 to vector<2x16xf32>
    %470 = arith.addf %469, %468 : vector<2x16xf32>
    %471 = arith.divf %469, %470 : vector<2x16xf32>
    %472 = vector.extract_strided_slice %431 {offsets = [0, 16], sizes = [2, 16], strides = [1, 1]} : vector<2x48xf32> to vector<2x16xf32>
    %473 = vector.extract_strided_slice %463 {offsets = [0, 16], sizes = [2, 16], strides = [1, 1]} : vector<2x48xf32> to vector<2x16xf32>
    %474 = arith.addf %472, %473 : vector<2x16xf32>
    %475 = arith.negf %474 : vector<2x16xf32>
    %476 = math.exp %475 : vector<2x16xf32>
    %cst_65 = arith.constant 1.000000e+00 : f32
    %477 = vector.broadcast %cst_65 : f32 to vector<2x16xf32>
    %478 = arith.addf %477, %476 : vector<2x16xf32>
    %479 = arith.divf %477, %478 : vector<2x16xf32>
    %480 = vector.extract_strided_slice %431 {offsets = [0, 32], sizes = [2, 16], strides = [1, 1]} : vector<2x48xf32> to vector<2x16xf32>
    %481 = vector.extract_strided_slice %463 {offsets = [0, 32], sizes = [2, 16], strides = [1, 1]} : vector<2x48xf32> to vector<2x16xf32>
    %482 = arith.mulf %471, %481 : vector<2x16xf32>
    %483 = arith.addf %480, %482 : vector<2x16xf32>
    %484 = math.tanh %483 : vector<2x16xf32>
    %cst_66 = arith.constant 1.000000e+00 : f32
    %485 = vector.broadcast %cst_66 : f32 to vector<2x16xf32>
    %486 = arith.subf %485, %479 : vector<2x16xf32>
    %487 = arith.mulf %486, %484 : vector<2x16xf32>
    %488 = arith.mulf %479, %429 : vector<2x16xf32>
    %489 = arith.addf %487, %488 : vector<2x16xf32>
    %c0_67 = arith.constant 0 : index
    %c0_68 = arith.constant 0 : index
    %490 = vector.load %arg1[%c0_67, %c0_68] : memref<32x16xf32, #tpu.memory_space<vmem>>, vector<32x16xf32>
    %c0_69 = arith.constant 0 : index
    %c0_70 = arith.constant 0 : index
    %491 = vector.load %arg7[%c0_69, %c0_70] : memref<16x16xf32, #tpu.memory_space<vmem>>, vector<16x16xf32>
    %cst_71 = arith.constant dense<0.000000e+00> : vector<32x16xf32>
    %492 = tpu.matmul %490, %491, %cst_71 {dimension_numbers = #tpu.dot_dimension_numbers<[1], [0], [0], [1], [0, 0, 1, 1], [], []>} : vector<32x16xf32>, vector<16x16xf32>, vector<32x16xf32> -> vector<32x16xf32>
    %c0_72 = arith.constant 0 : index
    %c0_73 = arith.constant 0 : index
    %493 = vector.load %arg8[%c0_72, %c0_73] : memref<1x16xf32, #tpu.memory_space<vmem>>, vector<1x16xf32>
    %494 = vector.broadcast %493 : vector<1x16xf32> to vector<32x16xf32>
    %495 = arith.addf %492, %494 : vector<32x16xf32>
    %c0_74 = arith.constant 0 : index
    %c0_75 = arith.constant 0 : index
    %496 = vector.load %arg2[%c0_74, %c0_75] : memref<8x16xf32, #tpu.memory_space<vmem>>, vector<8x16xf32>
    %c0_76 = arith.constant 0 : index
    %c0_77 = arith.constant 0 : index
    %497 = vector.load %arg9[%c0_76, %c0_77] : memref<16x16xf32, #tpu.memory_space<vmem>>, vector<16x16xf32>
    %cst_78 = arith.constant dense<0.000000e+00> : vector<8x16xf32>
    %498 = tpu.matmul %496, %497, %cst_78 {dimension_numbers = #tpu.dot_dimension_numbers<[1], [0], [0], [1], [0, 0, 1, 1], [], []>} : vector<8x16xf32>, vector<16x16xf32>, vector<8x16xf32> -> vector<8x16xf32>
    %c0_79 = arith.constant 0 : index
    %c0_80 = arith.constant 0 : index
    %499 = vector.load %arg10[%c0_79, %c0_80] : memref<1x16xf32, #tpu.memory_space<vmem>>, vector<1x16xf32>
    %500 = vector.broadcast %499 : vector<1x16xf32> to vector<8x16xf32>
    %501 = arith.addf %498, %500 : vector<8x16xf32>
    %cst_81 = arith.constant dense<0.000000e+00> : vector<32x8xf32>
    %502 = tpu.matmul %495, %501, %cst_81 {dimension_numbers = #tpu.dot_dimension_numbers<[1], [1], [0], [0], [0, 0, 1, 0], [], []>} : vector<32x16xf32>, vector<8x16xf32>, vector<32x8xf32> -> vector<32x8xf32>
    %cst_82 = arith.constant 2.500000e-01 : f32
    %503 = vector.broadcast %cst_82 : f32 to vector<32x8xf32>
    %504 = arith.mulf %502, %503 : vector<32x8xf32>
    %cst_83 = arith.constant dense<0xFF800000> : vector<32xf32>
    %505 = vector.multi_reduction <maximumf>, %504, %cst_83 [1] : vector<32x8xf32> to vector<32xf32>
    %506 = vector.shape_cast %505 : vector<32xf32> to vector<32x1xf32>
    %507 = vector.broadcast %506 : vector<32x1xf32> to vector<32x8xf32>
    %508 = arith.subf %504, %507 : vector<32x8xf32>
    %509 = math.exp %508 : vector<32x8xf32>
    %cst_84 = arith.constant dense<0.000000e+00> : vector<32xf32>
    %510 = vector.multi_reduction <add>, %509, %cst_84 [1] : vector<32x8xf32> to vector<32xf32>
    %511 = vector.shape_cast %510 : vector<32xf32> to vector<32x1xf32>
    %512 = tpu.reciprocal %511 {approx = true} : vector<32x1xf32> -> vector<32x1xf32>
    %513 = vector.broadcast %512 : vector<32x1xf32> to vector<32x8xf32>
    %514 = arith.mulf %509, %513 : vector<32x8xf32>
    %515 = vector.extract_strided_slice %42 {offsets = [0, 0], sizes = [1, 16], strides = [1, 1]} : vector<2x16xf32> to vector<1x16xf32>
    %516 = vector.extract_strided_slice %102 {offsets = [0, 0], sizes = [1, 16], strides = [1, 1]} : vector<2x16xf32> to vector<1x16xf32>
    %517 = vector.extract_strided_slice %162 {offsets = [0, 0], sizes = [1, 16], strides = [1, 1]} : vector<2x16xf32> to vector<1x16xf32>
    %518 = vector.extract_strided_slice %222 {offsets = [0, 0], sizes = [1, 16], strides = [1, 1]} : vector<2x16xf32> to vector<1x16xf32>
    %519 = vector.extract_strided_slice %282 {offsets = [0, 0], sizes = [1, 16], strides = [1, 1]} : vector<2x16xf32> to vector<1x16xf32>
    %520 = vector.extract_strided_slice %342 {offsets = [0, 0], sizes = [1, 16], strides = [1, 1]} : vector<2x16xf32> to vector<1x16xf32>
    %521 = vector.extract_strided_slice %402 {offsets = [0, 0], sizes = [1, 16], strides = [1, 1]} : vector<2x16xf32> to vector<1x16xf32>
    %522 = vector.extract_strided_slice %462 {offsets = [0, 0], sizes = [1, 16], strides = [1, 1]} : vector<2x16xf32> to vector<1x16xf32>
    %523 = tpu.concatenate %515, %516, %517, %518, %519, %520, %521, %522 in 0 : vector<1x16xf32>, vector<1x16xf32>, vector<1x16xf32>, vector<1x16xf32>, vector<1x16xf32>, vector<1x16xf32>, vector<1x16xf32>, vector<1x16xf32> -> vector<8x16xf32>
    %524 = vector.extract_strided_slice %489 {offsets = [0, 0], sizes = [1, 16], strides = [1, 1]} : vector<2x16xf32> to vector<1x16xf32>
    %525 = vector.extract_strided_slice %429 {offsets = [0, 0], sizes = [1, 16], strides = [1, 1]} : vector<2x16xf32> to vector<1x16xf32>
    %526 = vector.extract_strided_slice %369 {offsets = [0, 0], sizes = [1, 16], strides = [1, 1]} : vector<2x16xf32> to vector<1x16xf32>
    %527 = vector.extract_strided_slice %309 {offsets = [0, 0], sizes = [1, 16], strides = [1, 1]} : vector<2x16xf32> to vector<1x16xf32>
    %528 = vector.extract_strided_slice %249 {offsets = [0, 0], sizes = [1, 16], strides = [1, 1]} : vector<2x16xf32> to vector<1x16xf32>
    %529 = vector.extract_strided_slice %189 {offsets = [0, 0], sizes = [1, 16], strides = [1, 1]} : vector<2x16xf32> to vector<1x16xf32>
    %530 = vector.extract_strided_slice %129 {offsets = [0, 0], sizes = [1, 16], strides = [1, 1]} : vector<2x16xf32> to vector<1x16xf32>
    %531 = vector.extract_strided_slice %69 {offsets = [0, 0], sizes = [1, 16], strides = [1, 1]} : vector<2x16xf32> to vector<1x16xf32>
    %532 = tpu.concatenate %524, %525, %526, %527, %528, %529, %530, %531 in 0 : vector<1x16xf32>, vector<1x16xf32>, vector<1x16xf32>, vector<1x16xf32>, vector<1x16xf32>, vector<1x16xf32>, vector<1x16xf32>, vector<1x16xf32> -> vector<8x16xf32>
    %533 = tpu.concatenate %523, %532 in 1 : vector<8x16xf32>, vector<8x16xf32> -> vector<8x32xf32>
    %534 = vector.extract_strided_slice %514 {offsets = [0, 0], sizes = [16, 8], strides = [1, 1]} : vector<32x8xf32> to vector<16x8xf32>
    %cst_85 = arith.constant dense<0.000000e+00> : vector<16x32xf32>
    %535 = tpu.matmul %534, %533, %cst_85 {dimension_numbers = #tpu.dot_dimension_numbers<[1], [0], [0], [1], [0, 0, 1, 1], [], []>} : vector<16x8xf32>, vector<8x32xf32>, vector<16x32xf32> -> vector<16x32xf32>
    %536 = vector.extract_strided_slice %42 {offsets = [1, 0], sizes = [1, 16], strides = [1, 1]} : vector<2x16xf32> to vector<1x16xf32>
    %537 = vector.extract_strided_slice %102 {offsets = [1, 0], sizes = [1, 16], strides = [1, 1]} : vector<2x16xf32> to vector<1x16xf32>
    %538 = vector.extract_strided_slice %162 {offsets = [1, 0], sizes = [1, 16], strides = [1, 1]} : vector<2x16xf32> to vector<1x16xf32>
    %539 = vector.extract_strided_slice %222 {offsets = [1, 0], sizes = [1, 16], strides = [1, 1]} : vector<2x16xf32> to vector<1x16xf32>
    %540 = vector.extract_strided_slice %282 {offsets = [1, 0], sizes = [1, 16], strides = [1, 1]} : vector<2x16xf32> to vector<1x16xf32>
    %541 = vector.extract_strided_slice %342 {offsets = [1, 0], sizes = [1, 16], strides = [1, 1]} : vector<2x16xf32> to vector<1x16xf32>
    %542 = vector.extract_strided_slice %402 {offsets = [1, 0], sizes = [1, 16], strides = [1, 1]} : vector<2x16xf32> to vector<1x16xf32>
    %543 = vector.extract_strided_slice %462 {offsets = [1, 0], sizes = [1, 16], strides = [1, 1]} : vector<2x16xf32> to vector<1x16xf32>
    %544 = tpu.concatenate %536, %537, %538, %539, %540, %541, %542, %543 in 0 : vector<1x16xf32>, vector<1x16xf32>, vector<1x16xf32>, vector<1x16xf32>, vector<1x16xf32>, vector<1x16xf32>, vector<1x16xf32>, vector<1x16xf32> -> vector<8x16xf32>
    %545 = vector.extract_strided_slice %489 {offsets = [1, 0], sizes = [1, 16], strides = [1, 1]} : vector<2x16xf32> to vector<1x16xf32>
    %546 = vector.extract_strided_slice %429 {offsets = [1, 0], sizes = [1, 16], strides = [1, 1]} : vector<2x16xf32> to vector<1x16xf32>
    %547 = vector.extract_strided_slice %369 {offsets = [1, 0], sizes = [1, 16], strides = [1, 1]} : vector<2x16xf32> to vector<1x16xf32>
    %548 = vector.extract_strided_slice %309 {offsets = [1, 0], sizes = [1, 16], strides = [1, 1]} : vector<2x16xf32> to vector<1x16xf32>
    %549 = vector.extract_strided_slice %249 {offsets = [1, 0], sizes = [1, 16], strides = [1, 1]} : vector<2x16xf32> to vector<1x16xf32>
    %550 = vector.extract_strided_slice %189 {offsets = [1, 0], sizes = [1, 16], strides = [1, 1]} : vector<2x16xf32> to vector<1x16xf32>
    %551 = vector.extract_strided_slice %129 {offsets = [1, 0], sizes = [1, 16], strides = [1, 1]} : vector<2x16xf32> to vector<1x16xf32>
    %552 = vector.extract_strided_slice %69 {offsets = [1, 0], sizes = [1, 16], strides = [1, 1]} : vector<2x16xf32> to vector<1x16xf32>
    %553 = tpu.concatenate %545, %546, %547, %548, %549, %550, %551, %552 in 0 : vector<1x16xf32>, vector<1x16xf32>, vector<1x16xf32>, vector<1x16xf32>, vector<1x16xf32>, vector<1x16xf32>, vector<1x16xf32>, vector<1x16xf32> -> vector<8x16xf32>
    %554 = tpu.concatenate %544, %553 in 1 : vector<8x16xf32>, vector<8x16xf32> -> vector<8x32xf32>
    %555 = vector.extract_strided_slice %514 {offsets = [16, 0], sizes = [16, 8], strides = [1, 1]} : vector<32x8xf32> to vector<16x8xf32>
    %cst_86 = arith.constant dense<0.000000e+00> : vector<16x32xf32>
    %556 = tpu.matmul %555, %554, %cst_86 {dimension_numbers = #tpu.dot_dimension_numbers<[1], [0], [0], [1], [0, 0, 1, 1], [], []>} : vector<16x8xf32>, vector<8x32xf32>, vector<16x32xf32> -> vector<16x32xf32>
    %557 = tpu.concatenate %535, %556 in 0 : vector<16x32xf32>, vector<16x32xf32> -> vector<32x32xf32>
    %c0_87 = arith.constant 0 : index
    %c0_88 = arith.constant 0 : index
    %558 = vector.load %arg11[%c0_87, %c0_88] : memref<32x50xf32, #tpu.memory_space<vmem>>, vector<32x50xf32>
    %cst_89 = arith.constant dense<0.000000e+00> : vector<32x50xf32>
    %559 = tpu.matmul %557, %558, %cst_89 {dimension_numbers = #tpu.dot_dimension_numbers<[1], [0], [0], [1], [0, 0, 1, 1], [], []>} : vector<32x32xf32>, vector<32x50xf32>, vector<32x50xf32> -> vector<32x50xf32>
    %c0_90 = arith.constant 0 : index
    %c0_91 = arith.constant 0 : index
    %560 = vector.load %arg12[%c0_90, %c0_91] : memref<1x50xf32, #tpu.memory_space<vmem>>, vector<1x50xf32>
    %561 = vector.broadcast %560 : vector<1x50xf32> to vector<32x50xf32>
    %562 = arith.addf %559, %561 : vector<32x50xf32>
    %cst_92 = arith.constant 0.000000e+00 : f32
    %563 = vector.broadcast %cst_92 : f32 to vector<32x50xf32>
    %564 = arith.maximumf %562, %563 : vector<32x50xf32>
    %c0_93 = arith.constant 0 : index
    %c0_94 = arith.constant 0 : index
    %565 = vector.load %arg13[%c0_93, %c0_94] : memref<50x4xf32, #tpu.memory_space<vmem>>, vector<50x4xf32>
    %cst_95 = arith.constant dense<0.000000e+00> : vector<32x4xf32>
    %566 = tpu.matmul %564, %565, %cst_95 {dimension_numbers = #tpu.dot_dimension_numbers<[1], [0], [0], [1], [0, 0, 1, 1], [], []>} : vector<32x50xf32>, vector<50x4xf32>, vector<32x4xf32> -> vector<32x4xf32>
    %c0_96 = arith.constant 0 : index
    %c0_97 = arith.constant 0 : index
    %567 = vector.load %arg14[%c0_96, %c0_97] : memref<1x4xf32, #tpu.memory_space<vmem>>, vector<1x4xf32>
    %568 = vector.broadcast %567 : vector<1x4xf32> to vector<32x4xf32>
    %569 = arith.addf %566, %568 : vector<32x4xf32>
    %c0_98 = arith.constant 0 : index
    %c0_99 = arith.constant 0 : index
    %570 = vector.load %arg15[%c0_98, %c0_99] : memref<32x4xf32, #tpu.memory_space<vmem>>, vector<32x4xf32>
    tpu.vector_store %arg15[%c0_98, %c0_99], %569 {strides = array<i32>} : memref<32x4xf32, #tpu.memory_space<vmem>>, vector<32x4xf32>,
    return
  }
}

</mosaic_0001>

<llo_original>
// kernel: dec_mtan_rnn_forward.1
$region0: #{dec_mtan_rnn_forward.1}
  #allocation0 [shape = 'u32[]', space=smem, size = 0x4, offset = 0x4, fixed_abs, tag = 'smem constant byte address 0x4 - core index']
  #allocation1 [shape = 'u32[144,128]{1,0:T(1,128)}', space=vmem, size = 0x12000, scoped, tag = 'internal scratch']
  %s0 = inlined_call_operand.vmem [shape: f32[16,8], index: 0, kind: input, shape index: {}]
  %s1 = inlined_call_operand.vmem [shape: f32[32,16], index: 1, kind: input, shape index: {}]
  %s2 = inlined_call_operand.vmem [shape: f32[8,16], index: 2, kind: input, shape index: {}]
  %s3 = inlined_call_operand.vmem [shape: f32[8,96], index: 3, kind: input, shape index: {}]
  %s4 = inlined_call_operand.vmem [shape: f32[1,96], index: 4, kind: input, shape index: {}]
  %s5 = inlined_call_operand.vmem [shape: f32[32,96], index: 5, kind: input, shape index: {}]
  %s6 = inlined_call_operand.vmem [shape: f32[1,96], index: 6, kind: input, shape index: {}]
  %s7 = inlined_call_operand.vmem [shape: f32[16,16], index: 7, kind: input, shape index: {}]
  %s8 = inlined_call_operand.vmem [shape: f32[1,16], index: 8, kind: input, shape index: {}]
  %s9 = inlined_call_operand.vmem [shape: f32[16,16], index: 9, kind: input, shape index: {}]
  %s10 = inlined_call_operand.vmem [shape: f32[1,16], index: 10, kind: input, shape index: {}]
  %s11 = inlined_call_operand.vmem [shape: f32[32,50], index: 11, kind: input, shape index: {}]
  %s12 = inlined_call_operand.vmem [shape: f32[1,50], index: 12, kind: input, shape index: {}]
  %s13 = inlined_call_operand.vmem [shape: f32[50,4], index: 13, kind: input, shape index: {}]
  %s14 = inlined_call_operand.vmem [shape: f32[1,4], index: 14, kind: input, shape index: {}]
  %s15 = inlined_call_operand.vmem [shape: f32[32,4], index: 15, kind: output, shape index: {}]
  %s16 = sld [smem:[#allocation0]]
  $region70: #{dec_mtan_rnn_forward.1} parent=0
    _
  %s18 = ssub.s32 1, %s16
  %s19 = scalar_select 0, %s18, %s16
  // Predicated region
  $region2: #{dec_mtan_rnn_forward.1} parent=0 // pred_check
    _
  $region3: #{dec_mtan_rnn_forward.1} parent=0 // pred_check_branch
    %21 = sbr.rel (0) target = $region5
  $region4: #{dec_mtan_rnn_forward.1} parent=0 // pred_region
    _
  $region5: #{dec_mtan_rnn_forward.1} parent=0 // pred_fallthru
    _
  // Predicated region
  $region6: #{dec_mtan_rnn_forward.1} parent=0 // pred_check
    _
  $region7: #{dec_mtan_rnn_forward.1} parent=0 // pred_check_branch
    %23 = sbr.rel (0) target = $region9
  $region8: #{dec_mtan_rnn_forward.1} parent=0 // pred_region
    _
  $region9: #{dec_mtan_rnn_forward.1} parent=0 // pred_fallthru
    _
  // Predicated region
  $region10: #{dec_mtan_rnn_forward.1} parent=0 // pred_check
    _
  $region11: #{dec_mtan_rnn_forward.1} parent=0 // pred_check_branch
    %25 = sbr.rel (0) target = $region13
  $region12: #{dec_mtan_rnn_forward.1} parent=0 // pred_region
    _
  $region13: #{dec_mtan_rnn_forward.1} parent=0 // pred_fallthru
    _
  // Predicated region
  $region14: #{dec_mtan_rnn_forward.1} parent=0 // pred_check
    _
  $region15: #{dec_mtan_rnn_forward.1} parent=0 // pred_check_branch
    %27 = sbr.rel (0) target = $region17
  $region16: #{dec_mtan_rnn_forward.1} parent=0 // pred_region
    _
  $region17: #{dec_mtan_rnn_forward.1} parent=0 // pred_fallthru
    _
  // Predicated region
  $region18: #{dec_mtan_rnn_forward.1} parent=0 // pred_check
    _
  $region19: #{dec_mtan_rnn_forward.1} parent=0 // pred_check_branch
    %29 = sbr.rel (0) target = $region21
  $region20: #{dec_mtan_rnn_forward.1} parent=0 // pred_region
    _
  $region21: #{dec_mtan_rnn_forward.1} parent=0 // pred_fallthru
    _
  // Predicated region
  $region22: #{dec_mtan_rnn_forward.1} parent=0 // pred_check
    _
  $region23: #{dec_mtan_rnn_forward.1} parent=0 // pred_check_branch
    %31 = sbr.rel (0) target = $region25
  $region24: #{dec_mtan_rnn_forward.1} parent=0 // pred_region
    _
  $region25: #{dec_mtan_rnn_forward.1} parent=0 // pred_fallthru
    _
  // Predicated region
  $region26: #{dec_mtan_rnn_forward.1} parent=0 // pred_check
    _
  $region27: #{dec_mtan_rnn_forward.1} parent=0 // pred_check_branch
    %33 = sbr.rel (0) target = $region29
  $region28: #{dec_mtan_rnn_forward.1} parent=0 // pred_region
    _
  $region29: #{dec_mtan_rnn_forward.1} parent=0 // pred_fallthru
    _
  // Predicated region
  $region30: #{dec_mtan_rnn_forward.1} parent=0 // pred_check
    _
  $region31: #{dec_mtan_rnn_forward.1} parent=0 // pred_check_branch
    %35 = sbr.rel (0) target = $region33
  $region32: #{dec_mtan_rnn_forward.1} parent=0 // pred_region
    _
  $region33: #{dec_mtan_rnn_forward.1} parent=0 // pred_fallthru
    _
  // Predicated region
  $region34: #{dec_mtan_rnn_forward.1} parent=0 // pred_check
    _
  $region35: #{dec_mtan_rnn_forward.1} parent=0 // pred_check_branch
    %37 = sbr.rel (0) target = $region37
  $region36: #{dec_mtan_rnn_forward.1} parent=0 // pred_region
    _
  $region37: #{dec_mtan_rnn_forward.1} parent=0 // pred_fallthru
    _
  // Predicated region
  $region38: #{dec_mtan_rnn_forward.1} parent=0 // pred_check
    _
  $region39: #{dec_mtan_rnn_forward.1} parent=0 // pred_check_branch
    %39 = sbr.rel (0) target = $region41
  $region40: #{dec_mtan_rnn_forward.1} parent=0 // pred_region
    _
  $region41: #{dec_mtan_rnn_forward.1} parent=0 // pred_fallthru
    _
  // Predicated region
  $region42: #{dec_mtan_rnn_forward.1} parent=0 // pred_check
    _
  $region43: #{dec_mtan_rnn_forward.1} parent=0 // pred_check_branch
    %41 = sbr.rel (0) target = $region45
  $region44: #{dec_mtan_rnn_forward.1} parent=0 // pred_region
    _
  $region45: #{dec_mtan_rnn_forward.1} parent=0 // pred_fallthru
    _
  // Predicated region
  $region46: #{dec_mtan_rnn_forward.1} parent=0 // pred_check
    _
  $region47: #{dec_mtan_rnn_forward.1} parent=0 // pred_check_branch
    %43 = sbr.rel (0) target = $region49
  $region48: #{dec_mtan_rnn_forward.1} parent=0 // pred_region
    _
  $region49: #{dec_mtan_rnn_forward.1} parent=0 // pred_fallthru
    _
  // Predicated region
  $region50: #{dec_mtan_rnn_forward.1} parent=0 // pred_check
    _
  $region51: #{dec_mtan_rnn_forward.1} parent=0 // pred_check_branch
    %45 = sbr.rel (0) target = $region53
  $region52: #{dec_mtan_rnn_forward.1} parent=0 // pred_region
    _
  $region53: #{dec_mtan_rnn_forward.1} parent=0 // pred_fallthru
    _
  // Predicated region
  $region54: #{dec_mtan_rnn_forward.1} parent=0 // pred_check
    _
  $region55: #{dec_mtan_rnn_forward.1} parent=0 // pred_check_branch
    %47 = sbr.rel (0) target = $region57
  $region56: #{dec_mtan_rnn_forward.1} parent=0 // pred_region
    _
  $region57: #{dec_mtan_rnn_forward.1} parent=0 // pred_fallthru
    _
  // Predicated region
  $region58: #{dec_mtan_rnn_forward.1} parent=0 // pred_check
    _
  $region59: #{dec_mtan_rnn_forward.1} parent=0 // pred_check_branch
    %49 = sbr.rel (0) target = $region61
  $region60: #{dec_mtan_rnn_forward.1} parent=0 // pred_region
    _
  $region61: #{dec_mtan_rnn_forward.1} parent=0 // pred_fallthru
    _
  %v50 = vld [vmem:[%s0] sm:$0xff]
  %v51 = vld [vmem:[%s0 + $0x8] sm:$0xff]
  %v52 = vld [vmem:[%s3] sm:$0xff]
  %v53 = vld [vmem:[%s4] sm:$0x1]
  %v55 = vlaneseq
  %v56 = vshrl.u32 %v55, 7
  %v57 = vsub.s32 0, %v56
  %v58 = vrot.slane %v53, %v57
  %vm60 = vcmask 64512
  %v62 = vsel %vm60, %v50, 0
  %v65 = vsel %vm60, %v51, 0
  %67 = vmatprep.subr.mxu0 0.0
  %68 = vmatpush1.msra.mxu0 %v52
  %69 = vmatprep.subr.mxu0 0.0
  %70 = vmatpush1.msra.mxu0 0.0
  %71 = vmatprep.subr.mxu0 0.0
  %72 = vmatpush1.msra.mxu0 0.0
  %73 = vmatprep.subr.mxu0 0.0
  %74 = vmatpush1.msra.mxu0 0.0
  %75 = vmatprep.subr.mxu0 0.0
  %76 = vmatpush1.msra.mxu0 0.0
  %77 = vmatprep.subr.mxu0 0.0
  %78 = vmatpush1.msra.mxu0 0.0
  %79 = vmatprep.subr.mxu0 0.0
  %80 = vmatpush1.msra.mxu0 0.0
  %81 = vmatprep.subr.mxu0 0.0
  %82 = vmatpush1.msra.mxu0 0.0
  %83 = vmatprep.subr.mxu0 0.0
  %84 = vmatpush1.msra.mxu0 0.0
  %85 = vmatprep.subr.mxu0 0.0
  %86 = vmatpush1.msra.mxu0 0.0
  %87 = vmatprep.subr.mxu0 0.0
  %88 = vmatpush1.msra.mxu0 0.0
  %89 = vmatprep.subr.mxu0 0.0
  %90 = vmatpush1.msra.mxu0 0.0
  %91 = vmatprep.subr.mxu0 0.0
  %92 = vmatpush1.msra.mxu0 0.0
  %93 = vmatprep.subr.mxu0 0.0
  %94 = vmatpush1.msra.mxu0 0.0
  %95 = vmatprep.subr.mxu0 0.0
  %96 = vmatpush1.msra.mxu0 0.0
  %97 = vmatprep.subr.mxu0 0.0
  %98 = vmatpush1.msra.mxu0 0.0
  %99 = vmatprep.subr.mxu0 0.0
  %100 = vmatpush1.msra.mxu0 0.0
  %101 = vmatprep.subr.mxu0 0.0
  %102 = vmatpush1.msra.mxu0 0.0
  %103 = vmatprep.subr.mxu0 0.0
  %104 = vmatpush1.msra.mxu0 0.0
  %105 = vmatprep.subr.mxu0 0.0
  %106 = vmatpush1.msra.mxu0 0.0
  %107 = vmatprep.subr.mxu0 0.0
  %108 = vmatpush1.msra.mxu0 0.0
  %109 = vmatprep.subr.mxu0 0.0
  %110 = vmatpush1.msra.mxu0 0.0
  %111 = vmatprep.subr.mxu0 0.0
  %112 = vmatpush1.msra.mxu0 0.0
  %113 = vmatprep.subr.mxu0 0.0
  %114 = vmatpush1.msra.mxu0 0.0
  %115 = vmatprep.subr.mxu0 0.0
  %116 = vmatpush1.msra.mxu0 0.0
  %117 = vmatprep.subr.mxu0 0.0
  %118 = vmatpush1.msra.mxu0 0.0
  %119 = vmatprep.subr.mxu0 0.0
  %120 = vmatpush1.msra.mxu0 0.0
  %121 = vmatprep.subr.mxu0 0.0
  %122 = vmatpush1.msra.mxu0 0.0
  %123 = vmatprep.subr.mxu0 0.0
  %124 = vmatpush1.msra.mxu0 0.0
  %125 = vmatprep.subr.mxu0 0.0
  %126 = vmatpush1.msra.mxu0 0.0
  %127 = vmatprep.subr.mxu0 0.0
  %128 = vmatpush1.msra.mxu0 0.0
  %129 = vmatprep.subr.mxu0 0.0
  %130 = vmatpush1.msra.mxu0 0.0
  %131 = vmatprep.mubr.f32.mxu0 0.0
  %132 = vmatmul.mubr.f32.gmra.mrb[0].mxu0 %v62
  %v133 = vpop.f32.mrb[0].mxu0
  %v134 = vadd.f32 %v58, %v133
  %v135 = vpop.f32.mrb[0].mxu0
  %136 = vmatprep.mubr.f32.mxu0 0.0
  %137 = vmatmul.mubr.f32.gmra.mrb[0].mxu0 %v65
  %v138 = vpop.f32.mrb[0].mxu0
  %v139 = vadd.f32 %v58, %v138
  %v140 = vpop.f32.mrb[0].mxu0
  %141 = vdwg.mxu0
  %v142 = vld [vmem:[%s5] sm:$0xff]
  %v143 = vld [vmem:[%s5 + $0x8] sm:$0xff]
  %v144 = vld [vmem:[%s5 + $0x10] sm:$0xff]
  %v145 = vld [vmem:[%s5 + $0x18] sm:$0xff]
  %v146 = vld [vmem:[%s6] sm:$0x1]
  %v148 = vlaneseq
  %v149 = vshrl.u32 %v148, 7
  %v150 = vsub.s32 0, %v149
  %v151 = vrot.slane %v146, %v150
  %vm153 = vcmask 261120
  %v155 = vsel %vm153, 0.0, 0
  %157 = vmatprep.subr.mxu0 0.0
  %158 = vmatpush1.msra.mxu0 %v142
  %159 = vmatprep.subr.mxu0 0.0
  %160 = vmatpush1.msra.mxu0 %v143
  %161 = vmatprep.subr.mxu0 0.0
  %162 = vmatpush1.msra.mxu0 %v144
  %163 = vmatprep.subr.mxu0 0.0
  %164 = vmatpush1.msra.mxu0 %v145
  %165 = vmatprep.subr.mxu0 0.0
  %166 = vmatpush1.msra.mxu0 0.0
  %167 = vmatprep.subr.mxu0 0.0
  %168 = vmatpush1.msra.mxu0 0.0
  %169 = vmatprep.subr.mxu0 0.0
  %170 = vmatpush1.msra.mxu0 0.0
  %171 = vmatprep.subr.mxu0 0.0
  %172 = vmatpush1.msra.mxu0 0.0
  %173 = vmatprep.subr.mxu0 0.0
  %174 = vmatpush1.msra.mxu0 0.0
  %175 = vmatprep.subr.mxu0 0.0
  %176 = vmatpush1.msra.mxu0 0.0
  %177 = vmatprep.subr.mxu0 0.0
  %178 = vmatpush1.msra.mxu0 0.0
  %179 = vmatprep.subr.mxu0 0.0
  %180 = vmatpush1.msra.mxu0 0.0
  %181 = vmatprep.subr.mxu0 0.0
  %182 = vmatpush1.msra.mxu0 0.0
  %183 = vmatprep.subr.mxu0 0.0
  %184 = vmatpush1.msra.mxu0 0.0
  %185 = vmatprep.subr.mxu0 0.0
  %186 = vmatpush1.msra.mxu0 0.0
  %187 = vmatprep.subr.mxu0 0.0
  %188 = vmatpush1.msra.mxu0 0.0
  %189 = vmatprep.subr.mxu0 0.0
  %190 = vmatpush1.msra.mxu0 0.0
  %191 = vmatprep.subr.mxu0 0.0
  %192 = vmatpush1.msra.mxu0 0.0
  %193 = vmatprep.subr.mxu0 0.0
  %194 = vmatpush1.msra.mxu0 0.0
  %195 = vmatprep.subr.mxu0 0.0
  %196 = vmatpush1.msra.mxu0 0.0
  %197 = vmatprep.subr.mxu0 0.0
  %198 = vmatpush1.msra.mxu0 0.0
  %199 = vmatprep.subr.mxu0 0.0
  %200 = vmatpush1.msra.mxu0 0.0
  %201 = vmatprep.subr.mxu0 0.0
  %202 = vmatpush1.msra.mxu0 0.0
  %203 = vmatprep.subr.mxu0 0.0
  %204 = vmatpush1.msra.mxu0 0.0
  %205 = vmatprep.subr.mxu0 0.0
  %206 = vmatpush1.msra.mxu0 0.0
  %207 = vmatprep.subr.mxu0 0.0
  %208 = vmatpush1.msra.mxu0 0.0
  %209 = vmatprep.subr.mxu0 0.0
  %210 = vmatpush1.msra.mxu0 0.0
  %211 = vmatprep.subr.mxu0 0.0
  %212 = vmatpush1.msra.mxu0 0.0
  %213 = vmatprep.subr.mxu0 0.0
  %214 = vmatpush1.msra.mxu0 0.0
  %215 = vmatprep.subr.mxu0 0.0
  %216 = vmatpush1.msra.mxu0 0.0
  %217 = vmatprep.subr.mxu0 0.0
  %218 = vmatpush1.msra.mxu0 0.0
  %219 = vmatprep.subr.mxu0 0.0
  %220 = vmatpush1.msra.mxu0 0.0
  %221 = vmatprep.mubr.f32.mxu0 0.0
  %222 = vmatmul.mubr.f32.gmra.mrb[0].mxu0 %v155
  %v223 = vpop.f32.mrb[0].mxu0
  %v224 = vadd.f32 %v151, %v223
  %v225 = vpop.f32.mrb[0].mxu0
  %226 = vdwg.mxu0
  %v227 = vadd.f32 %v134, %v224
  %v228 = vxor.u32 %v227, 2147483648
  %v229 = vmul.f32 %v228, 1.442695
  %v230 = vpow.pop %v229
  %v231 = vadd.f32 %v230, 1.0
  %v232 = vrcp.pop %v231
  %v233 = vmul.f32 1.0, %v232
  %235 = vrot.lane.b32.xlu0 %v224, 96
  %v236 = vpop.permute.xlu0 %235
  %v238 = vmul.f32 %v233, %v236
  %240 = vrot.lane.b32.xlu0 %v238, 32
  %v241 = vpop.permute.xlu0 %240
  %v243 = vadd.f32 %v134, %v241
  %v244 = vtanh.pop %v243
  %v245 = vsub.f32 1.0, %v233
  %247 = vrot.lane.b32.xlu0 %v244, 112
  %v248 = vpop.permute.xlu0 %247
  %v250 = vmul.f32 %v245, %v248
  %v251 = vmul.f32 %v233, 0.0
  %v252 = vadd.f32 %v250, %v251
  %v253 = vrot.slane %v224, 2
  %v255 = vadd.f32 %v139, %v253
  %v256 = vxor.u32 %v255, 2147483648
  %v257 = vmul.f32 %v256, 1.442695
  %v258 = vpow.pop %v257
  %v259 = vadd.f32 %v258, 1.0
  %v260 = vrcp.pop %v259
  %v261 = vmul.f32 1.0, %v260
  %262 = vrot.lane.b32.xlu0 %v253, 96
  %v263 = vpop.permute.xlu0 %262
  %v265 = vmul.f32 %v261, %v263
  %267 = vrot.lane.b32.xlu0 %v265, 32
  %v268 = vpop.permute.xlu0 %267
  %v270 = vadd.f32 %v139, %v268
  %v271 = vtanh.pop %v270
  %v272 = vsub.f32 1.0, %v261
  %274 = vrot.lane.b32.xlu0 %v271, 112
  %v275 = vpop.permute.xlu0 %274
  %v277 = vmul.f32 %v272, %v275
  %v278 = vmul.f32 %v261, 0.0
  %v279 = vadd.f32 %v277, %v278
  %281 = vrot.lane.b32.xlu0 %v252, 112
  %v282 = vpop.permute.xlu0 %281
  %v285 = vrot.slane %v279, 6
  %286 = vrot.lane.b32.xlu0 %v285, 80
  %v287 = vpop.permute.xlu0 %286
  %vm289 = vcmask 130048
  %v290 = vsel %vm289, %v282, %v287
  %v292 = vsel %vm153, %v290, 0
  %294 = vmatprep.subr.mxu0 0.0
  %295 = vmatpush1.msra.mxu0 %v142
  %296 = vmatprep.subr.mxu0 0.0
  %297 = vmatpush1.msra.mxu0 %v143
  %298 = vmatprep.subr.mxu0 0.0
  %299 = vmatpush1.msra.mxu0 %v144
  %300 = vmatprep.subr.mxu0 0.0
  %301 = vmatpush1.msra.mxu0 %v145
  %302 = vmatprep.subr.mxu0 0.0
  %303 = vmatpush1.msra.mxu0 0.0
  %304 = vmatprep.subr.mxu0 0.0
  %305 = vmatpush1.msra.mxu0 0.0
  %306 = vmatprep.subr.mxu0 0.0
  %307 = vmatpush1.msra.mxu0 0.0
  %308 = vmatprep.subr.mxu0 0.0
  %309 = vmatpush1.msra.mxu0 0.0
  %310 = vmatprep.subr.mxu0 0.0
  %311 = vmatpush1.msra.mxu0 0.0
  %312 = vmatprep.subr.mxu0 0.0
  %313 = vmatpush1.msra.mxu0 0.0
  %314 = vmatprep.subr.mxu0 0.0
  %315 = vmatpush1.msra.mxu0 0.0
  %316 = vmatprep.subr.mxu0 0.0
  %317 = vmatpush1.msra.mxu0 0.0
  %318 = vmatprep.subr.mxu0 0.0
  %319 = vmatpush1.msra.mxu0 0.0
  %320 = vmatprep.subr.mxu0 0.0
  %321 = vmatpush1.msra.mxu0 0.0
  %322 = vmatprep.subr.mxu0 0.0
  %323 = vmatpush1.msra.mxu0 0.0
  %324 = vmatprep.subr.mxu0 0.0
  %325 = vmatpush1.msra.mxu0 0.0
  %326 = vmatprep.subr.mxu0 0.0
  %327 = vmatpush1.msra.mxu0 0.0
  %328 = vmatprep.subr.mxu0 0.0
  %329 = vmatpush1.msra.mxu0 0.0
  %330 = vmatprep.subr.mxu0 0.0
  %331 = vmatpush1.msra.mxu0 0.0
  %332 = vmatprep.subr.mxu0 0.0
  %333 = vmatpush1.msra.mxu0 0.0
  %334 = vmatprep.subr.mxu0 0.0
  %335 = vmatpush1.msra.mxu0 0.0
  %336 = vmatprep.subr.mxu0 0.0
  %337 = vmatpush1.msra.mxu0 0.0
  %338 = vmatprep.subr.mxu0 0.0
  %339 = vmatpush1.msra.mxu0 0.0
  %340 = vmatprep.subr.mxu0 0.0
  %341 = vmatpush1.msra.mxu0 0.0
  %342 = vmatprep.subr.mxu0 0.0
  %343 = vmatpush1.msra.mxu0 0.0
  %344 = vmatprep.subr.mxu0 0.0
  %345 = vmatpush1.msra.mxu0 0.0
  %346 = vmatprep.subr.mxu0 0.0
  %347 = vmatpush1.msra.mxu0 0.0
  %348 = vmatprep.subr.mxu0 0.0
  %349 = vmatpush1.msra.mxu0 0.0
  %350 = vmatprep.subr.mxu0 0.0
  %351 = vmatpush1.msra.mxu0 0.0
  %352 = vmatprep.subr.mxu0 0.0
  %353 = vmatpush1.msra.mxu0 0.0
  %354 = vmatprep.subr.mxu0 0.0
  %355 = vmatpush1.msra.mxu0 0.0
  %356 = vmatprep.subr.mxu0 0.0
  %357 = vmatpush1.msra.mxu0 0.0
  %358 = vmatprep.mubr.f32.mxu0 0.0
  %359 = vmatmul.mubr.f32.gmra.mrb[0].mxu0 %v292
  %v360 = vpop.f32.mrb[0].mxu0
  %v361 = vadd.f32 %v151, %v360
  %v362 = vpop.f32.mrb[0].mxu0
  %363 = vdwg.mxu0
  %v365 = vrot.slane %v361, 6
  %v367 = vadd.f32 %v134, %v365
  %v368 = vxor.u32 %v367, 2147483648
  %v369 = vmul.f32 %v368, 1.442695
  %v370 = vpow.pop %v369
  %v371 = vadd.f32 %v370, 1.0
  %v372 = vrcp.pop %v371
  %v373 = vmul.f32 1.0, %v372
  %374 = vrot.lane.b32.xlu0 %v365, 96
  %v375 = vpop.permute.xlu0 %374
  %v377 = vmul.f32 %v373, %v375
  %379 = vrot.lane.b32.xlu0 %v377, 32
  %v380 = vpop.permute.xlu0 %379
  %v382 = vadd.f32 %v134, %v380
  %v383 = vtanh.pop %v382
  %v384 = vsub.f32 1.0, %v373
  %386 = vrot.lane.b32.xlu0 %v383, 112
  %v387 = vpop.permute.xlu0 %386
  %v389 = vmul.f32 %v384, %v387
  %v390 = vrot.slane %v252, 6
  %v392 = vmul.f32 %v373, %v390
  %v393 = vadd.f32 %v389, %v392
  %v394 = vrot.slane %v361, 4
  %v396 = vadd.f32 %v139, %v394
  %v397 = vxor.u32 %v396, 2147483648
  %v398 = vmul.f32 %v397, 1.442695
  %v399 = vpow.pop %v398
  %v400 = vadd.f32 %v399, 1.0
  %v401 = vrcp.pop %v400
  %v402 = vmul.f32 1.0, %v401
  %403 = vrot.lane.b32.xlu0 %v394, 96
  %v404 = vpop.permute.xlu0 %403
  %v406 = vmul.f32 %v402, %v404
  %408 = vrot.lane.b32.xlu0 %v406, 32
  %v409 = vpop.permute.xlu0 %408
  %v411 = vadd.f32 %v139, %v409
  %v412 = vtanh.pop %v411
  %v413 = vsub.f32 1.0, %v402
  %415 = vrot.lane.b32.xlu0 %v412, 112
  %v416 = vpop.permute.xlu0 %415
  %v418 = vmul.f32 %v413, %v416
  %v419 = vrot.slane %v279, 2
  %v421 = vmul.f32 %v402, %v419
  %v422 = vadd.f32 %v418, %v421
  %424 = vrot.lane.b32.xlu0 %v393, 112
  %v425 = vpop.permute.xlu0 %424
  %v428 = vrot.slane %v422, 2
  %429 = vrot.lane.b32.xlu0 %v428, 80
  %v430 = vpop.permute.xlu0 %429
  %v432 = vsel %vm289, %v425, %v430
  %v434 = vrot.slane %v432, 2
  %v435 = vsel %vm153, %v434, 0
  %437 = vmatprep.subr.mxu0 0.0
  %438 = vmatpush1.msra.mxu0 %v142
  %439 = vmatprep.subr.mxu0 0.0
  %440 = vmatpush1.msra.mxu0 %v143
  %441 = vmatprep.subr.mxu0 0.0
  %442 = vmatpush1.msra.mxu0 %v144
  %443 = vmatprep.subr.mxu0 0.0
  %444 = vmatpush1.msra.mxu0 %v145
  %445 = vmatprep.subr.mxu0 0.0
  %446 = vmatpush1.msra.mxu0 0.0
  %447 = vmatprep.subr.mxu0 0.0
  %448 = vmatpush1.msra.mxu0 0.0
  %449 = vmatprep.subr.mxu0 0.0
  %450 = vmatpush1.msra.mxu0 0.0
  %451 = vmatprep.subr.mxu0 0.0
  %452 = vmatpush1.msra.mxu0 0.0
  %453 = vmatprep.subr.mxu0 0.0
  %454 = vmatpush1.msra.mxu0 0.0
  %455 = vmatprep.subr.mxu0 0.0
  %456 = vmatpush1.msra.mxu0 0.0
  %457 = vmatprep.subr.mxu0 0.0
  %458 = vmatpush1.msra.mxu0 0.0
  %459 = vmatprep.subr.mxu0 0.0
  %460 = vmatpush1.msra.mxu0 0.0
  %461 = vmatprep.subr.mxu0 0.0
  %462 = vmatpush1.msra.mxu0 0.0
  %463 = vmatprep.subr.mxu0 0.0
  %464 = vmatpush1.msra.mxu0 0.0
  %465 = vmatprep.subr.mxu0 0.0
  %466 = vmatpush1.msra.mxu0 0.0
  %467 = vmatprep.subr.mxu0 0.0
  %468 = vmatpush1.msra.mxu0 0.0
  %469 = vmatprep.subr.mxu0 0.0
  %470 = vmatpush1.msra.mxu0 0.0
  %471 = vmatprep.subr.mxu0 0.0
  %472 = vmatpush1.msra.mxu0 0.0
  %473 = vmatprep.subr.mxu0 0.0
  %474 = vmatpush1.msra.mxu0 0.0
  %475 = vmatprep.subr.mxu0 0.0
  %476 = vmatpush1.msra.mxu0 0.0
  %477 = vmatprep.subr.mxu0 0.0
  %478 = vmatpush1.msra.mxu0 0.0
  %479 = vmatprep.subr.mxu0 0.0
  %480 = vmatpush1.msra.mxu0 0.0
  %481 = vmatprep.subr.mxu0 0.0
  %482 = vmatpush1.msra.mxu0 0.0
  %483 = vmatprep.subr.mxu0 0.0
  %484 = vmatpush1.msra.mxu0 0.0
  %485 = vmatprep.subr.mxu0 0.0
  %486 = vmatpush1.msra.mxu0 0.0
  %487 = vmatprep.subr.mxu0 0.0
  %488 = vmatpush1.msra.mxu0 0.0
  %489 = vmatprep.subr.mxu0 0.0
  %490 = vmatpush1.msra.mxu0 0.0
  %491 = vmatprep.subr.mxu0 0.0
  %492 = vmatpush1.msra.mxu0 0.0
  %493 = vmatprep.subr.mxu0 0.0
  %494 = vmatpush1.msra.mxu0 0.0
  %495 = vmatprep.subr.mxu0 0.0
  %496 = vmatpush1.msra.mxu0 0.0
  %497 = vmatprep.subr.mxu0 0.0
  %498 = vmatpush1.msra.mxu0 0.0
  %499 = vmatprep.subr.mxu0 0.0
  %500 = vmatpush1.msra.mxu0 0.0
  %501 = vmatprep.mubr.f32.mxu0 0.0
  %502 = vmatmul.mubr.f32.gmra.mrb[0].mxu0 %v435
  %v503 = vpop.f32.mrb[0].mxu0
  %v504 = vadd.f32 %v151, %v503
  %v505 = vpop.f32.mrb[0].mxu0
  %506 = vdwg.mxu0
  %v508 = vrot.slane %v504, 4
  %v510 = vadd.f32 %v134, %v508
  %v511 = vxor.u32 %v510, 2147483648
  %v512 = vmul.f32 %v511, 1.442695
  %v513 = vpow.pop %v512
  %v514 = vadd.f32 %v513, 1.0
  %v515 = vrcp.pop %v514
  %v516 = vmul.f32 1.0, %v515
  %517 = vrot.lane.b32.xlu0 %v508, 96
  %v518 = vpop.permute.xlu0 %517
  %v520 = vmul.f32 %v516, %v518
  %522 = vrot.lane.b32.xlu0 %v520, 32
  %v523 = vpop.permute.xlu0 %522
  %v525 = vadd.f32 %v134, %v523
  %v526 = vtanh.pop %v525
  %v527 = vsub.f32 1.0, %v516
  %529 = vrot.lane.b32.xlu0 %v526, 112
  %v530 = vpop.permute.xlu0 %529
  %v532 = vmul.f32 %v527, %v530
  %v533 = vrot.slane %v393, 6
  %v535 = vmul.f32 %v516, %v533
  %v536 = vadd.f32 %v532, %v535
  %v537 = vrot.slane %v504, 6
  %v539 = vadd.f32 %v139, %v537
  %v540 = vxor.u32 %v539, 2147483648
  %v541 = vmul.f32 %v540, 1.442695
  %v542 = vpow.pop %v541
  %v543 = vadd.f32 %v542, 1.0
  %v544 = vrcp.pop %v543
  %v545 = vmul.f32 1.0, %v544
  %546 = vrot.lane.b32.xlu0 %v537, 96
  %v547 = vpop.permute.xlu0 %546
  %v549 = vmul.f32 %v545, %v547
  %551 = vrot.lane.b32.xlu0 %v549, 32
  %v552 = vpop.permute.xlu0 %551
  %v554 = vadd.f32 %v139, %v552
  %v555 = vtanh.pop %v554
  %v556 = vsub.f32 1.0, %v545
  %558 = vrot.lane.b32.xlu0 %v555, 112
  %v559 = vpop.permute.xlu0 %558
  %v561 = vmul.f32 %v556, %v559
  %v563 = vmul.f32 %v545, %v428
  %v564 = vadd.f32 %v561, %v563
  %566 = vrot.lane.b32.xlu0 %v536, 112
  %v567 = vpop.permute.xlu0 %566
  %v570 = vrot.slane %v564, 6
  %571 = vrot.lane.b32.xlu0 %v570, 80
  %v572 = vpop.permute.xlu0 %571
  %v574 = vsel %vm289, %v567, %v572
  %v576 = vrot.slane %v574, 4
  %v577 = vsel %vm153, %v576, 0
  %579 = vmatprep.subr.mxu0 0.0
  %580 = vmatpush1.msra.mxu0 %v142
  %581 = vmatprep.subr.mxu0 0.0
  %582 = vmatpush1.msra.mxu0 %v143
  %583 = vmatprep.subr.mxu0 0.0
  %584 = vmatpush1.msra.mxu0 %v144
  %585 = vmatprep.subr.mxu0 0.0
  %586 = vmatpush1.msra.mxu0 %v145
  %587 = vmatprep.subr.mxu0 0.0
  %588 = vmatpush1.msra.mxu0 0.0
  %589 = vmatprep.subr.mxu0 0.0
  %590 = vmatpush1.msra.mxu0 0.0
  %591 = vmatprep.subr.mxu0 0.0
  %592 = vmatpush1.msra.mxu0 0.0
  %593 = vmatprep.subr.mxu0 0.0
  %594 = vmatpush1.msra.mxu0 0.0
  %595 = vmatprep.subr.mxu0 0.0
  %596 = vmatpush1.msra.mxu0 0.0
  %597 = vmatprep.subr.mxu0 0.0
  %598 = vmatpush1.msra.mxu0 0.0
  %599 = vmatprep.subr.mxu0 0.0
  %600 = vmatpush1.msra.mxu0 0.0
  %601 = vmatprep.subr.mxu0 0.0
  %602 = vmatpush1.msra.mxu0 0.0
  %603 = vmatprep.subr.mxu0 0.0
  %604 = vmatpush1.msra.mxu0 0.0
  %605 = vmatprep.subr.mxu0 0.0
  %606 = vmatpush1.msra.mxu0 0.0
  %607 = vmatprep.subr.mxu0 0.0
  %608 = vmatpush1.msra.mxu0 0.0
  %609 = vmatprep.subr.mxu0 0.0
  %610 = vmatpush1.msra.mxu0 0.0
  %611 = vmatprep.subr.mxu0 0.0
  %612 = vmatpush1.msra.mxu0 0.0
  %613 = vmatprep.subr.mxu0 0.0
  %614 = vmatpush1.msra.mxu0 0.0
  %615 = vmatprep.subr.mxu0 0.0
  %616 = vmatpush1.msra.mxu0 0.0
  %617 = vmatprep.subr.mxu0 0.0
  %618 = vmatpush1.msra.mxu0 0.0
  %619 = vmatprep.subr.mxu0 0.0
  %620 = vmatpush1.msra.mxu0 0.0
  %621 = vmatprep.subr.mxu0 0.0
  %622 = vmatpush1.msra.mxu0 0.0
  %623 = vmatprep.subr.mxu0 0.0
  %624 = vmatpush1.msra.mxu0 0.0
  %625 = vmatprep.subr.mxu0 0.0
  %626 = vmatpush1.msra.mxu0 0.0
  %627 = vmatprep.subr.mxu0 0.0
  %628 = vmatpush1.msra.mxu0 0.0
  %629 = vmatprep.subr.mxu0 0.0
  %630 = vmatpush1.msra.mxu0 0.0
  %631 = vmatprep.subr.mxu0 0.0
  %632 = vmatpush1.msra.mxu0 0.0
  %633 = vmatprep.subr.mxu0 0.0
  %634 = vmatpush1.msra.mxu0 0.0
  %635 = vmatprep.subr.mxu0 0.0
  %636 = vmatpush1.msra.mxu0 0.0
  %637 = vmatprep.subr.mxu0 0.0
  %638 = vmatpush1.msra.mxu0 0.0
  %639 = vmatprep.subr.mxu0 0.0
  %640 = vmatpush1.msra.mxu0 0.0
  %641 = vmatprep.subr.mxu0 0.0
  %642 = vmatpush1.msra.mxu0 0.0
  %643 = vmatprep.mubr.f32.mxu0 0.0
  %644 = vmatmul.mubr.f32.gmra.mrb[0].mxu0 %v577
  %v645 = vpop.f32.mrb[0].mxu0
  %v646 = vadd.f32 %v151, %v645
  %v647 = vpop.f32.mrb[0].mxu0
  %648 = vdwg.mxu0
  %v650 = vrot.slane %v646, 2
  %v652 = vadd.f32 %v134, %v650
  %v653 = vxor.u32 %v652, 2147483648
  %v654 = vmul.f32 %v653, 1.442695
  %v655 = vpow.pop %v654
  %v656 = vadd.f32 %v655, 1.0
  %v657 = vrcp.pop %v656
  %v658 = vmul.f32 1.0, %v657
  %659 = vrot.lane.b32.xlu0 %v650, 96
  %v660 = vpop.permute.xlu0 %659
  %v662 = vmul.f32 %v658, %v660
  %664 = vrot.lane.b32.xlu0 %v662, 32
  %v665 = vpop.permute.xlu0 %664
  %v667 = vadd.f32 %v134, %v665
  %v668 = vtanh.pop %v667
  %v669 = vsub.f32 1.0, %v658
  %671 = vrot.lane.b32.xlu0 %v668, 112
  %v672 = vpop.permute.xlu0 %671
  %v674 = vmul.f32 %v669, %v672
  %v675 = vrot.slane %v536, 6
  %v677 = vmul.f32 %v658, %v675
  %v678 = vadd.f32 %v674, %v677
  %v679 = vadd.f32 %v139, %v646
  %v680 = vxor.u32 %v679, 2147483648
  %v681 = vmul.f32 %v680, 1.442695
  %v682 = vpow.pop %v681
  %v683 = vadd.f32 %v682, 1.0
  %v684 = vrcp.pop %v683
  %v685 = vmul.f32 1.0, %v684
  %686 = vrot.lane.b32.xlu0 %v646, 96
  %v687 = vpop.permute.xlu0 %686
  %v689 = vmul.f32 %v685, %v687
  %691 = vrot.lane.b32.xlu0 %v689, 32
  %v692 = vpop.permute.xlu0 %691
  %v694 = vadd.f32 %v139, %v692
  %v695 = vtanh.pop %v694
  %v696 = vsub.f32 1.0, %v685
  %698 = vrot.lane.b32.xlu0 %v695, 112
  %v699 = vpop.permute.xlu0 %698
  %v701 = vmul.f32 %v696, %v699
  %v702 = vrot.slane %v564, 2
  %v704 = vmul.f32 %v685, %v702
  %v705 = vadd.f32 %v701, %v704
  %707 = vrot.lane.b32.xlu0 %v678, 112
  %v708 = vpop.permute.xlu0 %707
  %v711 = vrot.slane %v705, 2
  %712 = vrot.lane.b32.xlu0 %v711, 80
  %v713 = vpop.permute.xlu0 %712
  %v715 = vsel %vm289, %v708, %v713
  %v717 = vrot.slane %v715, 6
  %v718 = vsel %vm153, %v717, 0
  %720 = vmatprep.subr.mxu0 0.0
  %721 = vmatpush1.msra.mxu0 %v142
  %722 = vmatprep.subr.mxu0 0.0
  %723 = vmatpush1.msra.mxu0 %v143
  %724 = vmatprep.subr.mxu0 0.0
  %725 = vmatpush1.msra.mxu0 %v144
  %726 = vmatprep.subr.mxu0 0.0
  %727 = vmatpush1.msra.mxu0 %v145
  %728 = vmatprep.subr.mxu0 0.0
  %729 = vmatpush1.msra.mxu0 0.0
  %730 = vmatprep.subr.mxu0 0.0
  %731 = vmatpush1.msra.mxu0 0.0
  %732 = vmatprep.subr.mxu0 0.0
  %733 = vmatpush1.msra.mxu0 0.0
  %734 = vmatprep.subr.mxu0 0.0
  %735 = vmatpush1.msra.mxu0 0.0
  %736 = vmatprep.subr.mxu0 0.0
  %737 = vmatpush1.msra.mxu0 0.0
  %738 = vmatprep.subr.mxu0 0.0
  %739 = vmatpush1.msra.mxu0 0.0
  %740 = vmatprep.subr.mxu0 0.0
  %741 = vmatpush1.msra.mxu0 0.0
  %742 = vmatprep.subr.mxu0 0.0
  %743 = vmatpush1.msra.mxu0 0.0
  %744 = vmatprep.subr.mxu0 0.0
  %745 = vmatpush1.msra.mxu0 0.0
  %746 = vmatprep.subr.mxu0 0.0
  %747 = vmatpush1.msra.mxu0 0.0
  %748 = vmatprep.subr.mxu0 0.0
  %749 = vmatpush1.msra.mxu0 0.0
  %750 = vmatprep.subr.mxu0 0.0
  %751 = vmatpush1.msra.mxu0 0.0
  %752 = vmatprep.subr.mxu0 0.0
  %753 = vmatpush1.msra.mxu0 0.0
  %754 = vmatprep.subr.mxu0 0.0
  %755 = vmatpush1.msra.mxu0 0.0
  %756 = vmatprep.subr.mxu0 0.0
  %757 = vmatpush1.msra.mxu0 0.0
  %758 = vmatprep.subr.mxu0 0.0
  %759 = vmatpush1.msra.mxu0 0.0
  %760 = vmatprep.subr.mxu0 0.0
  %761 = vmatpush1.msra.mxu0 0.0
  %762 = vmatprep.subr.mxu0 0.0
  %763 = vmatpush1.msra.mxu0 0.0
  %764 = vmatprep.subr.mxu0 0.0
  %765 = vmatpush1.msra.mxu0 0.0
  %766 = vmatprep.subr.mxu0 0.0
  %767 = vmatpush1.msra.mxu0 0.0
  %768 = vmatprep.subr.mxu0 0.0
  %769 = vmatpush1.msra.mxu0 0.0
  %770 = vmatprep.subr.mxu0 0.0
  %771 = vmatpush1.msra.mxu0 0.0
  %772 = vmatprep.subr.mxu0 0.0
  %773 = vmatpush1.msra.mxu0 0.0
  %774 = vmatprep.subr.mxu0 0.0
  %775 = vmatpush1.msra.mxu0 0.0
  %776 = vmatprep.subr.mxu0 0.0
  %777 = vmatpush1.msra.mxu0 0.0
  %778 = vmatprep.subr.mxu0 0.0
  %779 = vmatpush1.msra.mxu0 0.0
  %780 = vmatprep.subr.mxu0 0.0
  %781 = vmatpush1.msra.mxu0 0.0
  %782 = vmatprep.subr.mxu0 0.0
  %783 = vmatpush1.msra.mxu0 0.0
  %784 = vmatprep.mubr.f32.mxu0 0.0
  %785 = vmatmul.mubr.f32.gmra.mrb[0].mxu0 %v718
  %v786 = vpop.f32.mrb[0].mxu0
  %v787 = vadd.f32 %v151, %v786
  %v788 = vpop.f32.mrb[0].mxu0
  %789 = vdwg.mxu0
  %v790 = vadd.f32 %v139, %v787
  %v791 = vxor.u32 %v790, 2147483648
  %v792 = vmul.f32 %v791, 1.442695
  %v793 = vpow.pop %v792
  %v794 = vadd.f32 %v793, 1.0
  %v795 = vrcp.pop %v794
  %v796 = vmul.f32 1.0, %v795
  %798 = vrot.lane.b32.xlu0 %v787, 96
  %v799 = vpop.permute.xlu0 %798
  %v801 = vmul.f32 %v796, %v799
  %803 = vrot.lane.b32.xlu0 %v801, 32
  %v804 = vpop.permute.xlu0 %803
  %v806 = vadd.f32 %v139, %v804
  %v807 = vtanh.pop %v806
  %v808 = vsub.f32 1.0, %v796
  %810 = vrot.lane.b32.xlu0 %v807, 112
  %v811 = vpop.permute.xlu0 %810
  %v813 = vmul.f32 %v808, %v811
  %v814 = vrot.slane %v678, 6
  %v816 = vmul.f32 %v796, %v814
  %v817 = vadd.f32 %v813, %v816
  %v818 = vrot.slane %v787, 2
  %v820 = vadd.f32 %v134, %v818
  %v821 = vxor.u32 %v820, 2147483648
  %v822 = vmul.f32 %v821, 1.442695
  %v823 = vpow.pop %v822
  %v824 = vadd.f32 %v823, 1.0
  %v825 = vrcp.pop %v824
  %v826 = vmul.f32 1.0, %v825
  %827 = vrot.lane.b32.xlu0 %v818, 96
  %v828 = vpop.permute.xlu0 %827
  %v830 = vmul.f32 %v826, %v828
  %832 = vrot.lane.b32.xlu0 %v830, 32
  %v833 = vpop.permute.xlu0 %832
  %v835 = vadd.f32 %v134, %v833
  %v836 = vtanh.pop %v835
  %v837 = vsub.f32 1.0, %v826
  %839 = vrot.lane.b32.xlu0 %v836, 112
  %v840 = vpop.permute.xlu0 %839
  %v842 = vmul.f32 %v837, %v840
  %v844 = vmul.f32 %v826, %v711
  %v845 = vadd.f32 %v842, %v844
  %847 = vrot.lane.b32.xlu0 %v817, 112
  %v848 = vpop.permute.xlu0 %847
  %v851 = vrot.slane %v845, 6
  %852 = vrot.lane.b32.xlu0 %v851, 80
  %v853 = vpop.permute.xlu0 %852
  %v855 = vsel %vm289, %v848, %v853
  %v857 = vsel %vm153, %v855, 0
  %859 = vmatprep.subr.mxu0 0.0
  %860 = vmatpush1.msra.mxu0 %v142
  %861 = vmatprep.subr.mxu0 0.0
  %862 = vmatpush1.msra.mxu0 %v143
  %863 = vmatprep.subr.mxu0 0.0
  %864 = vmatpush1.msra.mxu0 %v144
  %865 = vmatprep.subr.mxu0 0.0
  %866 = vmatpush1.msra.mxu0 %v145
  %867 = vmatprep.subr.mxu0 0.0
  %868 = vmatpush1.msra.mxu0 0.0
  %869 = vmatprep.subr.mxu0 0.0
  %870 = vmatpush1.msra.mxu0 0.0
  %871 = vmatprep.subr.mxu0 0.0
  %872 = vmatpush1.msra.mxu0 0.0
  %873 = vmatprep.subr.mxu0 0.0
  %874 = vmatpush1.msra.mxu0 0.0
  %875 = vmatprep.subr.mxu0 0.0
  %876 = vmatpush1.msra.mxu0 0.0
  %877 = vmatprep.subr.mxu0 0.0
  %878 = vmatpush1.msra.mxu0 0.0
  %879 = vmatprep.subr.mxu0 0.0
  %880 = vmatpush1.msra.mxu0 0.0
  %881 = vmatprep.subr.mxu0 0.0
  %882 = vmatpush1.msra.mxu0 0.0
  %883 = vmatprep.subr.mxu0 0.0
  %884 = vmatpush1.msra.mxu0 0.0
  %885 = vmatprep.subr.mxu0 0.0
  %886 = vmatpush1.msra.mxu0 0.0
  %887 = vmatprep.subr.mxu0 0.0
  %888 = vmatpush1.msra.mxu0 0.0
  %889 = vmatprep.subr.mxu0 0.0
  %890 = vmatpush1.msra.mxu0 0.0
  %891 = vmatprep.subr.mxu0 0.0
  %892 = vmatpush1.msra.mxu0 0.0
  %893 = vmatprep.subr.mxu0 0.0
  %894 = vmatpush1.msra.mxu0 0.0
  %895 = vmatprep.subr.mxu0 0.0
  %896 = vmatpush1.msra.mxu0 0.0
  %897 = vmatprep.subr.mxu0 0.0
  %898 = vmatpush1.msra.mxu0 0.0
  %899 = vmatprep.subr.mxu0 0.0
  %900 = vmatpush1.msra.mxu0 0.0
  %901 = vmatprep.subr.mxu0 0.0
  %902 = vmatpush1.msra.mxu0 0.0
  %903 = vmatprep.subr.mxu0 0.0
  %904 = vmatpush1.msra.mxu0 0.0
  %905 = vmatprep.subr.mxu0 0.0
  %906 = vmatpush1.msra.mxu0 0.0
  %907 = vmatprep.subr.mxu0 0.0
  %908 = vmatpush1.msra.mxu0 0.0
  %909 = vmatprep.subr.mxu0 0.0
  %910 = vmatpush1.msra.mxu0 0.0
  %911 = vmatprep.subr.mxu0 0.0
  %912 = vmatpush1.msra.mxu0 0.0
  %913 = vmatprep.subr.mxu0 0.0
  %914 = vmatpush1.msra.mxu0 0.0
  %915 = vmatprep.subr.mxu0 0.0
  %916 = vmatpush1.msra.mxu0 0.0
  %917 = vmatprep.subr.mxu0 0.0
  %918 = vmatpush1.msra.mxu0 0.0
  %919 = vmatprep.subr.mxu0 0.0
  %920 = vmatpush1.msra.mxu0 0.0
  %921 = vmatprep.subr.mxu0 0.0
  %922 = vmatpush1.msra.mxu0 0.0
  %923 = vmatprep.mubr.f32.mxu0 0.0
  %924 = vmatmul.mubr.f32.gmra.mrb[0].mxu0 %v857
  %v925 = vpop.f32.mrb[0].mxu0
  %v926 = vadd.f32 %v151, %v925
  %v927 = vpop.f32.mrb[0].mxu0
  %928 = vdwg.mxu0
  %v930 = vrot.slane %v926, 6
  %v932 = vadd.f32 %v139, %v930
  %v933 = vxor.u32 %v932, 2147483648
  %v934 = vmul.f32 %v933, 1.442695
  %v935 = vpow.pop %v934
  %v936 = vadd.f32 %v935, 1.0
  %v937 = vrcp.pop %v936
  %v938 = vmul.f32 1.0, %v937
  %939 = vrot.lane.b32.xlu0 %v930, 96
  %v940 = vpop.permute.xlu0 %939
  %v942 = vmul.f32 %v938, %v940
  %944 = vrot.lane.b32.xlu0 %v942, 32
  %v945 = vpop.permute.xlu0 %944
  %v947 = vadd.f32 %v139, %v945
  %v948 = vtanh.pop %v947
  %v949 = vsub.f32 1.0, %v938
  %951 = vrot.lane.b32.xlu0 %v948, 112
  %v952 = vpop.permute.xlu0 %951
  %v954 = vmul.f32 %v949, %v952
  %v955 = vrot.slane %v817, 6
  %v957 = vmul.f32 %v938, %v955
  %v958 = vadd.f32 %v954, %v957
  %v959 = vrot.slane %v926, 4
  %v961 = vadd.f32 %v134, %v959
  %v962 = vxor.u32 %v961, 2147483648
  %v963 = vmul.f32 %v962, 1.442695
  %v964 = vpow.pop %v963
  %v965 = vadd.f32 %v964, 1.0
  %v966 = vrcp.pop %v965
  %v967 = vmul.f32 1.0, %v966
  %968 = vrot.lane.b32.xlu0 %v959, 96
  %v969 = vpop.permute.xlu0 %968
  %v971 = vmul.f32 %v967, %v969
  %973 = vrot.lane.b32.xlu0 %v971, 32
  %v974 = vpop.permute.xlu0 %973
  %v976 = vadd.f32 %v134, %v974
  %v977 = vtanh.pop %v976
  %v978 = vsub.f32 1.0, %v967
  %980 = vrot.lane.b32.xlu0 %v977, 112
  %v981 = vpop.permute.xlu0 %980
  %v983 = vmul.f32 %v978, %v981
  %v984 = vrot.slane %v845, 2
  %v986 = vmul.f32 %v967, %v984
  %v987 = vadd.f32 %v983, %v986
  %989 = vrot.lane.b32.xlu0 %v958, 112
  %v990 = vpop.permute.xlu0 %989
  %v993 = vrot.slane %v987, 2
  %994 = vrot.lane.b32.xlu0 %v993, 80
  %v995 = vpop.permute.xlu0 %994
  %v997 = vsel %vm289, %v990, %v995
  %v999 = vrot.slane %v997, 2
  %v1000 = vsel %vm153, %v999, 0
  %1002 = vmatprep.subr.mxu0 0.0
  %1003 = vmatpush1.msra.mxu0 %v142
  %1004 = vmatprep.subr.mxu0 0.0
  %1005 = vmatpush1.msra.mxu0 %v143
  %1006 = vmatprep.subr.mxu0 0.0
  %1007 = vmatpush1.msra.mxu0 %v144
  %1008 = vmatprep.subr.mxu0 0.0
  %1009 = vmatpush1.msra.mxu0 %v145
  %1010 = vmatprep.subr.mxu0 0.0
  %1011 = vmatpush1.msra.mxu0 0.0
  %1012 = vmatprep.subr.mxu0 0.0
  %1013 = vmatpush1.msra.mxu0 0.0
  %1014 = vmatprep.subr.mxu0 0.0
  %1015 = vmatpush1.msra.mxu0 0.0
  %1016 = vmatprep.subr.mxu0 0.0
  %1017 = vmatpush1.msra.mxu0 0.0
  %1018 = vmatprep.subr.mxu0 0.0
  %1019 = vmatpush1.msra.mxu0 0.0
  %1020 = vmatprep.subr.mxu0 0.0
  %1021 = vmatpush1.msra.mxu0 0.0
  %1022 = vmatprep.subr.mxu0 0.0
  %1023 = vmatpush1.msra.mxu0 0.0
  %1024 = vmatprep.subr.mxu0 0.0
  %1025 = vmatpush1.msra.mxu0 0.0
  %1026 = vmatprep.subr.mxu0 0.0
  %1027 = vmatpush1.msra.mxu0 0.0
  %1028 = vmatprep.subr.mxu0 0.0
  %1029 = vmatpush1.msra.mxu0 0.0
  %1030 = vmatprep.subr.mxu0 0.0
  %1031 = vmatpush1.msra.mxu0 0.0
  %1032 = vmatprep.subr.mxu0 0.0
  %1033 = vmatpush1.msra.mxu0 0.0
  %1034 = vmatprep.subr.mxu0 0.0
  %1035 = vmatpush1.msra.mxu0 0.0
  %1036 = vmatprep.subr.mxu0 0.0
  %1037 = vmatpush1.msra.mxu0 0.0
  %1038 = vmatprep.subr.mxu0 0.0
  %1039 = vmatpush1.msra.mxu0 0.0
  %1040 = vmatprep.subr.mxu0 0.0
  %1041 = vmatpush1.msra.mxu0 0.0
  %1042 = vmatprep.subr.mxu0 0.0
  %1043 = vmatpush1.msra.mxu0 0.0
  %1044 = vmatprep.subr.mxu0 0.0
  %1045 = vmatpush1.msra.mxu0 0.0
  %1046 = vmatprep.subr.mxu0 0.0
  %1047 = vmatpush1.msra.mxu0 0.0
  %1048 = vmatprep.subr.mxu0 0.0
  %1049 = vmatpush1.msra.mxu0 0.0
  %1050 = vmatprep.subr.mxu0 0.0
  %1051 = vmatpush1.msra.mxu0 0.0
  %1052 = vmatprep.subr.mxu0 0.0
  %1053 = vmatpush1.msra.mxu0 0.0
  %1054 = vmatprep.subr.mxu0 0.0
  %1055 = vmatpush1.msra.mxu0 0.0
  %1056 = vmatprep.subr.mxu0 0.0
  %1057 = vmatpush1.msra.mxu0 0.0
  %1058 = vmatprep.subr.mxu0 0.0
  %1059 = vmatpush1.msra.mxu0 0.0
  %1060 = vmatprep.subr.mxu0 0.0
  %1061 = vmatpush1.msra.mxu0 0.0
  %1062 = vmatprep.subr.mxu0 0.0
  %1063 = vmatpush1.msra.mxu0 0.0
  %1064 = vmatprep.subr.mxu0 0.0
  %1065 = vmatpush1.msra.mxu0 0.0
  %1066 = vmatprep.mubr.f32.mxu0 0.0
  %1067 = vmatmul.mubr.f32.gmra.mrb[0].mxu0 %v1000
  %v1068 = vpop.f32.mrb[0].mxu0
  %v1069 = vadd.f32 %v151, %v1068
  %v1070 = vpop.f32.mrb[0].mxu0
  %1071 = vdwg.mxu0
  %v1073 = vrot.slane %v1069, 4
  %v1075 = vadd.f32 %v139, %v1073
  %v1076 = vxor.u32 %v1075, 2147483648
  %v1077 = vmul.f32 %v1076, 1.442695
  %v1078 = vpow.pop %v1077
  %v1079 = vadd.f32 %v1078, 1.0
  %v1080 = vrcp.pop %v1079
  %v1081 = vmul.f32 1.0, %v1080
  %1082 = vrot.lane.b32.xlu0 %v1073, 96
  %v1083 = vpop.permute.xlu0 %1082
  %v1085 = vmul.f32 %v1081, %v1083
  %1087 = vrot.lane.b32.xlu0 %v1085, 32
  %v1088 = vpop.permute.xlu0 %1087
  %v1090 = vadd.f32 %v139, %v1088
  %v1091 = vtanh.pop %v1090
  %v1092 = vsub.f32 1.0, %v1081
  %1094 = vrot.lane.b32.xlu0 %v1091, 112
  %v1095 = vpop.permute.xlu0 %1094
  %v1097 = vmul.f32 %v1092, %v1095
  %v1098 = vrot.slane %v958, 6
  %v1100 = vmul.f32 %v1081, %v1098
  %v1101 = vadd.f32 %v1097, %v1100
  %v1102 = vrot.slane %v1069, 6
  %v1104 = vadd.f32 %v134, %v1102
  %v1105 = vxor.u32 %v1104, 2147483648
  %v1106 = vmul.f32 %v1105, 1.442695
  %v1107 = vpow.pop %v1106
  %v1108 = vadd.f32 %v1107, 1.0
  %v1109 = vrcp.pop %v1108
  %v1110 = vmul.f32 1.0, %v1109
  %1111 = vrot.lane.b32.xlu0 %v1102, 96
  %v1112 = vpop.permute.xlu0 %1111
  %v1114 = vmul.f32 %v1110, %v1112
  %1116 = vrot.lane.b32.xlu0 %v1114, 32
  %v1117 = vpop.permute.xlu0 %1116
  %v1119 = vadd.f32 %v134, %v1117
  %v1120 = vtanh.pop %v1119
  %v1121 = vsub.f32 1.0, %v1110
  %1123 = vrot.lane.b32.xlu0 %v1120, 112
  %v1124 = vpop.permute.xlu0 %1123
  %v1126 = vmul.f32 %v1121, %v1124
  %v1128 = vmul.f32 %v1110, %v993
  %v1129 = vadd.f32 %v1126, %v1128
  %1131 = vrot.lane.b32.xlu0 %v1101, 112
  %v1132 = vpop.permute.xlu0 %1131
  %v1135 = vrot.slane %v1129, 6
  %1136 = vrot.lane.b32.xlu0 %v1135, 80
  %v1137 = vpop.permute.xlu0 %1136
  %v1139 = vsel %vm289, %v1132, %v1137
  %v1141 = vrot.slane %v1139, 4
  %v1142 = vsel %vm153, %v1141, 0
  %1144 = vmatprep.subr.mxu0 0.0
  %1145 = vmatpush1.msra.mxu0 %v142
  %1146 = vmatprep.subr.mxu0 0.0
  %1147 = vmatpush1.msra.mxu0 %v143
  %1148 = vmatprep.subr.mxu0 0.0
  %1149 = vmatpush1.msra.mxu0 %v144
  %1150 = vmatprep.subr.mxu0 0.0
  %1151 = vmatpush1.msra.mxu0 %v145
  %1152 = vmatprep.subr.mxu0 0.0
  %1153 = vmatpush1.msra.mxu0 0.0
  %1154 = vmatprep.subr.mxu0 0.0
  %1155 = vmatpush1.msra.mxu0 0.0
  %1156 = vmatprep.subr.mxu0 0.0
  %1157 = vmatpush1.msra.mxu0 0.0
  %1158 = vmatprep.subr.mxu0 0.0
  %1159 = vmatpush1.msra.mxu0 0.0
  %1160 = vmatprep.subr.mxu0 0.0
  %1161 = vmatpush1.msra.mxu0 0.0
  %1162 = vmatprep.subr.mxu0 0.0
  %1163 = vmatpush1.msra.mxu0 0.0
  %1164 = vmatprep.subr.mxu0 0.0
  %1165 = vmatpush1.msra.mxu0 0.0
  %1166 = vmatprep.subr.mxu0 0.0
  %1167 = vmatpush1.msra.mxu0 0.0
  %1168 = vmatprep.subr.mxu0 0.0
  %1169 = vmatpush1.msra.mxu0 0.0
  %1170 = vmatprep.subr.mxu0 0.0
  %1171 = vmatpush1.msra.mxu0 0.0
  %1172 = vmatprep.subr.mxu0 0.0
  %1173 = vmatpush1.msra.mxu0 0.0
  %1174 = vmatprep.subr.mxu0 0.0
  %1175 = vmatpush1.msra.mxu0 0.0
  %1176 = vmatprep.subr.mxu0 0.0
  %1177 = vmatpush1.msra.mxu0 0.0
  %1178 = vmatprep.subr.mxu0 0.0
  %1179 = vmatpush1.msra.mxu0 0.0
  %1180 = vmatprep.subr.mxu0 0.0
  %1181 = vmatpush1.msra.mxu0 0.0
  %1182 = vmatprep.subr.mxu0 0.0
  %1183 = vmatpush1.msra.mxu0 0.0
  %1184 = vmatprep.subr.mxu0 0.0
  %1185 = vmatpush1.msra.mxu0 0.0
  %1186 = vmatprep.subr.mxu0 0.0
  %1187 = vmatpush1.msra.mxu0 0.0
  %1188 = vmatprep.subr.mxu0 0.0
  %1189 = vmatpush1.msra.mxu0 0.0
  %1190 = vmatprep.subr.mxu0 0.0
  %1191 = vmatpush1.msra.mxu0 0.0
  %1192 = vmatprep.subr.mxu0 0.0
  %1193 = vmatpush1.msra.mxu0 0.0
  %1194 = vmatprep.subr.mxu0 0.0
  %1195 = vmatpush1.msra.mxu0 0.0
  %1196 = vmatprep.subr.mxu0 0.0
  %1197 = vmatpush1.msra.mxu0 0.0
  %1198 = vmatprep.subr.mxu0 0.0
  %1199 = vmatpush1.msra.mxu0 0.0
  %1200 = vmatprep.subr.mxu0 0.0
  %1201 = vmatpush1.msra.mxu0 0.0
  %1202 = vmatprep.subr.mxu0 0.0
  %1203 = vmatpush1.msra.mxu0 0.0
  %1204 = vmatprep.subr.mxu0 0.0
  %1205 = vmatpush1.msra.mxu0 0.0
  %1206 = vmatprep.subr.mxu0 0.0
  %1207 = vmatpush1.msra.mxu0 0.0
  %1208 = vmatprep.mubr.f32.mxu0 0.0
  %1209 = vmatmul.mubr.f32.gmra.mrb[0].mxu0 %v1142
  %v1210 = vpop.f32.mrb[0].mxu0
  %v1211 = vadd.f32 %v151, %v1210
  %v1212 = vpop.f32.mrb[0].mxu0
  %1213 = vdwg.mxu0
  %v1215 = vrot.slane %v1211, 2
  %v1217 = vadd.f32 %v139, %v1215
  %v1218 = vxor.u32 %v1217, 2147483648
  %v1219 = vmul.f32 %v1218, 1.442695
  %v1220 = vpow.pop %v1219
  %v1221 = vadd.f32 %v1220, 1.0
  %v1222 = vrcp.pop %v1221
  %v1223 = vmul.f32 1.0, %v1222
  %1224 = vrot.lane.b32.xlu0 %v1215, 96
  %v1225 = vpop.permute.xlu0 %1224
  %v1227 = vmul.f32 %v1223, %v1225
  %1229 = vrot.lane.b32.xlu0 %v1227, 32
  %v1230 = vpop.permute.xlu0 %1229
  %v1232 = vadd.f32 %v139, %v1230
  %v1233 = vtanh.pop %v1232
  %v1234 = vsub.f32 1.0, %v1223
  %1236 = vrot.lane.b32.xlu0 %v1233, 112
  %v1237 = vpop.permute.xlu0 %1236
  %v1239 = vmul.f32 %v1234, %v1237
  %v1240 = vrot.slane %v1101, 6
  %v1242 = vmul.f32 %v1223, %v1240
  %v1243 = vadd.f32 %v1239, %v1242
  %v1244 = vadd.f32 %v134, %v1211
  %v1245 = vxor.u32 %v1244, 2147483648
  %v1246 = vmul.f32 %v1245, 1.442695
  %v1247 = vpow.pop %v1246
  %v1248 = vadd.f32 %v1247, 1.0
  %v1249 = vrcp.pop %v1248
  %v1250 = vmul.f32 1.0, %v1249
  %1251 = vrot.lane.b32.xlu0 %v1211, 96
  %v1252 = vpop.permute.xlu0 %1251
  %v1254 = vmul.f32 %v1250, %v1252
  %1256 = vrot.lane.b32.xlu0 %v1254, 32
  %v1257 = vpop.permute.xlu0 %1256
  %v1259 = vadd.f32 %v134, %v1257
  %v1260 = vtanh.pop %v1259
  %v1261 = vsub.f32 1.0, %v1250
  %1263 = vrot.lane.b32.xlu0 %v1260, 112
  %v1264 = vpop.permute.xlu0 %1263
  %v1266 = vmul.f32 %v1261, %v1264
  %v1267 = vrot.slane %v1129, 2
  %v1269 = vmul.f32 %v1250, %v1267
  %v1270 = vadd.f32 %v1266, %v1269
  %v1271 = vld [vmem:[%s1] sm:$0xff]
  %v1272 = vld [vmem:[%s1 + $0x8] sm:$0xff]
  %v1273 = vld [vmem:[%s1 + $0x10] sm:$0xff]
  %v1274 = vld [vmem:[%s1 + $0x18] sm:$0xff]
  %v1275 = vld [vmem:[%s7] sm:$0xff]
  %v1276 = vld [vmem:[%s7 + $0x8] sm:$0xff]
  %v1277 = vld [vmem:[%s8] sm:$0x1]
  %v1279 = vlaneseq
  %v1280 = vshrl.u32 %v1279, 7
  %v1281 = vsub.s32 0, %v1280
  %v1282 = vrot.slane %v1277, %v1281
  %v1285 = vsel %vm289, %v1271, 0
  %v1288 = vsel %vm289, %v1272, 0
  %v1291 = vsel %vm289, %v1273, 0
  %v1294 = vsel %vm289, %v1274, 0
  %1296 = vmatprep.subr.mxu0 0.0
  %1297 = vmatpush1.msra.mxu0 %v1275
  %1298 = vmatprep.subr.mxu0 0.0
  %1299 = vmatpush1.msra.mxu0 %v1276
  %1300 = vmatprep.subr.mxu0 0.0
  %1301 = vmatpush1.msra.mxu0 0.0
  %1302 = vmatprep.subr.mxu0 0.0
  %1303 = vmatpush1.msra.mxu0 0.0
  %1304 = vmatprep.subr.mxu0 0.0
  %1305 = vmatpush1.msra.mxu0 0.0
  %1306 = vmatprep.subr.mxu0 0.0
  %1307 = vmatpush1.msra.mxu0 0.0
  %1308 = vmatprep.subr.mxu0 0.0
  %1309 = vmatpush1.msra.mxu0 0.0
  %1310 = vmatprep.subr.mxu0 0.0
  %1311 = vmatpush1.msra.mxu0 0.0
  %1312 = vmatprep.subr.mxu0 0.0
  %1313 = vmatpush1.msra.mxu0 0.0
  %1314 = vmatprep.subr.mxu0 0.0
  %1315 = vmatpush1.msra.mxu0 0.0
  %1316 = vmatprep.subr.mxu0 0.0
  %1317 = vmatpush1.msra.mxu0 0.0
  %1318 = vmatprep.subr.mxu0 0.0
  %1319 = vmatpush1.msra.mxu0 0.0
  %1320 = vmatprep.subr.mxu0 0.0
  %1321 = vmatpush1.msra.mxu0 0.0
  %1322 = vmatprep.subr.mxu0 0.0
  %1323 = vmatpush1.msra.mxu0 0.0
  %1324 = vmatprep.subr.mxu0 0.0
  %1325 = vmatpush1.msra.mxu0 0.0
  %1326 = vmatprep.subr.mxu0 0.0
  %1327 = vmatpush1.msra.mxu0 0.0
  %1328 = vmatprep.subr.mxu0 0.0
  %1329 = vmatpush1.msra.mxu0 0.0
  %1330 = vmatprep.subr.mxu0 0.0
  %1331 = vmatpush1.msra.mxu0 0.0
  %1332 = vmatprep.subr.mxu0 0.0
  %1333 = vmatpush1.msra.mxu0 0.0
  %1334 = vmatprep.subr.mxu0 0.0
  %1335 = vmatpush1.msra.mxu0 0.0
  %1336 = vmatprep.subr.mxu0 0.0
  %1337 = vmatpush1.msra.mxu0 0.0
  %1338 = vmatprep.subr.mxu0 0.0
  %1339 = vmatpush1.msra.mxu0 0.0
  %1340 = vmatprep.subr.mxu0 0.0
  %1341 = vmatpush1.msra.mxu0 0.0
  %1342 = vmatprep.subr.mxu0 0.0
  %1343 = vmatpush1.msra.mxu0 0.0
  %1344 = vmatprep.subr.mxu0 0.0
  %1345 = vmatpush1.msra.mxu0 0.0
  %1346 = vmatprep.subr.mxu0 0.0
  %1347 = vmatpush1.msra.mxu0 0.0
  %1348 = vmatprep.subr.mxu0 0.0
  %1349 = vmatpush1.msra.mxu0 0.0
  %1350 = vmatprep.subr.mxu0 0.0
  %1351 = vmatpush1.msra.mxu0 0.0
  %1352 = vmatprep.subr.mxu0 0.0
  %1353 = vmatpush1.msra.mxu0 0.0
  %1354 = vmatprep.subr.mxu0 0.0
  %1355 = vmatpush1.msra.mxu0 0.0
  %1356 = vmatprep.subr.mxu0 0.0
  %1357 = vmatpush1.msra.mxu0 0.0
  %1358 = vmatprep.subr.mxu0 0.0
  %1359 = vmatpush1.msra.mxu0 0.0
  %1360 = vmatprep.mubr.f32.mxu0 0.0
  %1361 = vmatmul.mubr.f32.gmra.mrb[0].mxu0 %v1285
  %v1362 = vpop.f32.mrb[0].mxu0
  %v1363 = vadd.f32 %v1282, %v1362
  %v1364 = vpop.f32.mrb[0].mxu0
  %1365 = vmatprep.mubr.f32.mxu0 0.0
  %1366 = vmatmul.mubr.f32.gmra.mrb[0].mxu0 %v1288
  %v1367 = vpop.f32.mrb[0].mxu0
  %v1368 = vadd.f32 %v1282, %v1367
  %v1369 = vpop.f32.mrb[0].mxu0
  %1370 = vmatprep.mubr.f32.mxu0 0.0
  %1371 = vmatmul.mubr.f32.gmra.mrb[0].mxu0 %v1291
  %v1372 = vpop.f32.mrb[0].mxu0
  %v1373 = vadd.f32 %v1282, %v1372
  %v1374 = vpop.f32.mrb[0].mxu0
  %1375 = vmatprep.mubr.f32.mxu0 0.0
  %1376 = vmatmul.mubr.f32.gmra.mrb[0].mxu0 %v1294
  %v1377 = vpop.f32.mrb[0].mxu0
  %v1378 = vadd.f32 %v1282, %v1377
  %v1379 = vpop.f32.mrb[0].mxu0
  %1380 = vdwg.mxu0
  %v1381 = vld [vmem:[%s2] sm:$0xff]
  %v1382 = vld [vmem:[%s9] sm:$0xff]
  %v1383 = vld [vmem:[%s9 + $0x8] sm:$0xff]
  %v1384 = vld [vmem:[%s10] sm:$0x1]
  %v1386 = vlaneseq
  %v1387 = vshrl.u32 %v1386, 7
  %v1388 = vsub.s32 0, %v1387
  %v1389 = vrot.slane %v1384, %v1388
  %v1392 = vsel %vm289, %v1381, 0
  %1394 = vmatprep.subr.mxu0 0.0
  %1395 = vmatpush1.msra.mxu0 %v1382
  %1396 = vmatprep.subr.mxu0 0.0
  %1397 = vmatpush1.msra.mxu0 %v1383
  %1398 = vmatprep.subr.mxu0 0.0
  %1399 = vmatpush1.msra.mxu0 0.0
  %1400 = vmatprep.subr.mxu0 0.0
  %1401 = vmatpush1.msra.mxu0 0.0
  %1402 = vmatprep.subr.mxu0 0.0
  %1403 = vmatpush1.msra.mxu0 0.0
  %1404 = vmatprep.subr.mxu0 0.0
  %1405 = vmatpush1.msra.mxu0 0.0
  %1406 = vmatprep.subr.mxu0 0.0
  %1407 = vmatpush1.msra.mxu0 0.0
  %1408 = vmatprep.subr.mxu0 0.0
  %1409 = vmatpush1.msra.mxu0 0.0
  %1410 = vmatprep.subr.mxu0 0.0
  %1411 = vmatpush1.msra.mxu0 0.0
  %1412 = vmatprep.subr.mxu0 0.0
  %1413 = vmatpush1.msra.mxu0 0.0
  %1414 = vmatprep.subr.mxu0 0.0
  %1415 = vmatpush1.msra.mxu0 0.0
  %1416 = vmatprep.subr.mxu0 0.0
  %1417 = vmatpush1.msra.mxu0 0.0
  %1418 = vmatprep.subr.mxu0 0.0
  %1419 = vmatpush1.msra.mxu0 0.0
  %1420 = vmatprep.subr.mxu0 0.0
  %1421 = vmatpush1.msra.mxu0 0.0
  %1422 = vmatprep.subr.mxu0 0.0
  %1423 = vmatpush1.msra.mxu0 0.0
  %1424 = vmatprep.subr.mxu0 0.0
  %1425 = vmatpush1.msra.mxu0 0.0
  %1426 = vmatprep.subr.mxu0 0.0
  %1427 = vmatpush1.msra.mxu0 0.0
  %1428 = vmatprep.subr.mxu0 0.0
  %1429 = vmatpush1.msra.mxu0 0.0
  %1430 = vmatprep.subr.mxu0 0.0
  %1431 = vmatpush1.msra.mxu0 0.0
  %1432 = vmatprep.subr.mxu0 0.0
  %1433 = vmatpush1.msra.mxu0 0.0
  %1434 = vmatprep.subr.mxu0 0.0
  %1435 = vmatpush1.msra.mxu0 0.0
  %1436 = vmatprep.subr.mxu0 0.0
  %1437 = vmatpush1.msra.mxu0 0.0
  %1438 = vmatprep.subr.mxu0 0.0
  %1439 = vmatpush1.msra.mxu0 0.0
  %1440 = vmatprep.subr.mxu0 0.0
  %1441 = vmatpush1.msra.mxu0 0.0
  %1442 = vmatprep.subr.mxu0 0.0
  %1443 = vmatpush1.msra.mxu0 0.0
  %1444 = vmatprep.subr.mxu0 0.0
  %1445 = vmatpush1.msra.mxu0 0.0
  %1446 = vmatprep.subr.mxu0 0.0
  %1447 = vmatpush1.msra.mxu0 0.0
  %1448 = vmatprep.subr.mxu0 0.0
  %1449 = vmatpush1.msra.mxu0 0.0
  %1450 = vmatprep.subr.mxu0 0.0
  %1451 = vmatpush1.msra.mxu0 0.0
  %1452 = vmatprep.subr.mxu0 0.0
  %1453 = vmatpush1.msra.mxu0 0.0
  %1454 = vmatprep.subr.mxu0 0.0
  %1455 = vmatpush1.msra.mxu0 0.0
  %1456 = vmatprep.subr.mxu0 0.0
  %1457 = vmatpush1.msra.mxu0 0.0
  %1458 = vmatprep.mubr.f32.mxu0 0.0
  %1459 = vmatmul.mubr.f32.gmra.mrb[0].mxu0 %v1392
  %v1460 = vpop.f32.mrb[0].mxu0
  %v1461 = vadd.f32 %v1389, %v1460
  %v1462 = vpop.f32.mrb[0].mxu0
  %1463 = vdwg.mxu0
  %v1465 = vsel %vm289, %v1363, 0
  %v1468 = vsel %vm289, %v1368, 0
  %v1471 = vsel %vm289, %v1373, 0
  %v1474 = vsel %vm289, %v1378, 0
  %v1477 = vsel %vm289, %v1461, 0
  %1479 = vmatprep.subr.mxu0 0.0
  %1480 = vmatpush1.xpose.msra.mxu0 %v1477
  %1481 = vmatprep.subr.mxu0 0.0
  %1482 = vmatpush1.xpose.msra.mxu0 0.0
  %1483 = vmatprep.subr.mxu0 0.0
  %1484 = vmatpush1.xpose.msra.mxu0 0.0
  %1485 = vmatprep.subr.mxu0 0.0
  %1486 = vmatpush1.xpose.msra.mxu0 0.0
  %1487 = vmatprep.subr.mxu0 0.0
  %1488 = vmatpush1.xpose.msra.mxu0 0.0
  %1489 = vmatprep.subr.mxu0 0.0
  %1490 = vmatpush1.xpose.msra.mxu0 0.0
  %1491 = vmatprep.subr.mxu0 0.0
  %1492 = vmatpush1.xpose.msra.mxu0 0.0
  %1493 = vmatprep.subr.mxu0 0.0
  %1494 = vmatpush1.xpose.msra.mxu0 0.0
  %1495 = vmatprep.subr.mxu0 0.0
  %1496 = vmatpush1.xpose.msra.mxu0 0.0
  %1497 = vmatprep.subr.mxu0 0.0
  %1498 = vmatpush1.xpose.msra.mxu0 0.0
  %1499 = vmatprep.subr.mxu0 0.0
  %1500 = vmatpush1.xpose.msra.mxu0 0.0
  %1501 = vmatprep.subr.mxu0 0.0
  %1502 = vmatpush1.xpose.msra.mxu0 0.0
  %1503 = vmatprep.subr.mxu0 0.0
  %1504 = vmatpush1.xpose.msra.mxu0 0.0
  %1505 = vmatprep.subr.mxu0 0.0
  %1506 = vmatpush1.xpose.msra.mxu0 0.0
  %1507 = vmatprep.subr.mxu0 0.0
  %1508 = vmatpush1.xpose.msra.mxu0 0.0
  %1509 = vmatprep.subr.mxu0 0.0
  %1510 = vmatpush1.xpose.msra.mxu0 0.0
  %1511 = vmatprep.subr.mxu0 0.0
  %1512 = vmatpush1.xpose.msra.mxu0 0.0
  %1513 = vmatprep.subr.mxu0 0.0
  %1514 = vmatpush1.xpose.msra.mxu0 0.0
  %1515 = vmatprep.subr.mxu0 0.0
  %1516 = vmatpush1.xpose.msra.mxu0 0.0
  %1517 = vmatprep.subr.mxu0 0.0
  %1518 = vmatpush1.xpose.msra.mxu0 0.0
  %1519 = vmatprep.subr.mxu0 0.0
  %1520 = vmatpush1.xpose.msra.mxu0 0.0
  %1521 = vmatprep.subr.mxu0 0.0
  %1522 = vmatpush1.xpose.msra.mxu0 0.0
  %1523 = vmatprep.subr.mxu0 0.0
  %1524 = vmatpush1.xpose.msra.mxu0 0.0
  %1525 = vmatprep.subr.mxu0 0.0
  %1526 = vmatpush1.xpose.msra.mxu0 0.0
  %1527 = vmatprep.subr.mxu0 0.0
  %1528 = vmatpush1.xpose.msra.mxu0 0.0
  %1529 = vmatprep.subr.mxu0 0.0
  %1530 = vmatpush1.xpose.msra.mxu0 0.0
  %1531 = vmatprep.subr.mxu0 0.0
  %1532 = vmatpush1.xpose.msra.mxu0 0.0
  %1533 = vmatprep.subr.mxu0 0.0
  %1534 = vmatpush1.xpose.msra.mxu0 0.0
  %1535 = vmatprep.subr.mxu0 0.0
  %1536 = vmatpush1.xpose.msra.mxu0 0.0
  %1537 = vmatprep.subr.mxu0 0.0
  %1538 = vmatpush1.xpose.msra.mxu0 0.0
  %1539 = vmatprep.subr.mxu0 0.0
  %1540 = vmatpush1.xpose.msra.mxu0 0.0
  %1541 = vmatprep.subr.mxu0 0.0
  %1542 = vmatpush1.xpose.msra.mxu0 0.0
  %1543 = vmatprep.mubr.f32.mxu0 0.0
  %1544 = vmatmul.mubr.f32.gmra.mrb[0].mxu0 %v1465
  %v1545 = vpop.f32.mrb[0].mxu0
  %v1546 = vadd.f32 0.0, %v1545
  %v1547 = vpop.f32.mrb[0].mxu0
  %1548 = vmatprep.mubr.f32.mxu0 0.0
  %1549 = vmatmul.mubr.f32.gmra.mrb[0].mxu0 %v1468
  %v1550 = vpop.f32.mrb[0].mxu0
  %v1551 = vadd.f32 0.0, %v1550
  %v1552 = vpop.f32.mrb[0].mxu0
  %1553 = vmatprep.mubr.f32.mxu0 0.0
  %1554 = vmatmul.mubr.f32.gmra.mrb[0].mxu0 %v1471
  %v1555 = vpop.f32.mrb[0].mxu0
  %v1556 = vadd.f32 0.0, %v1555
  %v1557 = vpop.f32.mrb[0].mxu0
  %1558 = vmatprep.mubr.f32.mxu0 0.0
  %1559 = vmatmul.mubr.f32.gmra.mrb[0].mxu0 %v1474
  %v1560 = vpop.f32.mrb[0].mxu0
  %v1561 = vadd.f32 0.0, %v1560
  %v1562 = vpop.f32.mrb[0].mxu0
  %1563 = vdwg.mxu0
  %v1564 = vmul.f32 %v1546, 0.25
  %v1565 = vmul.f32 %v1551, 0.25
  %v1566 = vmul.f32 %v1556, 0.25
  %v1567 = vmul.f32 %v1561, 0.25
  %v1568 = vsel %vm60, %v1564, -inf
  %1569 = vmax.xlane.f32.xlu0 %v1568
  %v1570 = vpop.xlane.xlu0 %1569
  %v1571 = vsel %vm60, %v1565, -inf
  %1572 = vmax.xlane.f32.xlu0 %v1571
  %v1573 = vpop.xlane.xlu0 %1572
  %v1574 = vsel %vm60, %v1566, -inf
  %1575 = vmax.xlane.f32.xlu0 %v1574
  %v1576 = vpop.xlane.xlu0 %1575
  %v1577 = vsel %vm60, %v1567, -inf
  %1578 = vmax.xlane.f32.xlu0 %v1577
  %v1579 = vpop.xlane.xlu0 %1578
  %v1580 = vsub.f32 %v1564, %v1570
  %v1581 = vsub.f32 %v1565, %v1573
  %v1582 = vsub.f32 %v1566, %v1576
  %v1583 = vsub.f32 %v1567, %v1579
  %v1584 = vmul.f32 %v1580, 1.442695
  %v1585 = vpow.pop %v1584
  %v1586 = vmul.f32 %v1581, 1.442695
  %v1587 = vpow.pop %v1586
  %v1588 = vmul.f32 %v1582, 1.442695
  %v1589 = vpow.pop %v1588
  %v1590 = vmul.f32 %v1583, 1.442695
  %v1591 = vpow.pop %v1590
  %v1592 = vsel %vm60, %v1585, 0.0
  %1593 = vadd.xlane.f32.xlu0 %v1592
  %v1594 = vpop.xlane.xlu0 %1593
  %v1595 = vsel %vm60, %v1587, 0.0
  %1596 = vadd.xlane.f32.xlu0 %v1595
  %v1597 = vpop.xlane.xlu0 %1596
  %v1598 = vsel %vm60, %v1589, 0.0
  %1599 = vadd.xlane.f32.xlu0 %v1598
  %v1600 = vpop.xlane.xlu0 %1599
  %v1601 = vsel %vm60, %v1591, 0.0
  %1602 = vadd.xlane.f32.xlu0 %v1601
  %v1603 = vpop.xlane.xlu0 %1602
  %v1604 = vrcp.pop %v1594
  %v1605 = vrcp.pop %v1597
  %v1606 = vrcp.pop %v1600
  %v1607 = vrcp.pop %v1603
  %v1608 = vmul.f32 %v1585, %v1604
  %v1609 = vmul.f32 %v1587, %v1605
  %v1610 = vmul.f32 %v1589, %v1606
  %v1611 = vmul.f32 %v1591, %v1607
  %v1612 = vrot.slane %v393, 1
  %v1614 = vrot.slane %v536, 2
  %v1616 = vrot.slane %v678, 3
  %v1618 = vrot.slane %v817, 4
  %v1620 = vrot.slane %v958, 5
  %v1623 = vrot.slane %v1243, 7
  %vm1625 = vcmask 1040384
  %v1626 = vsel %vm1625, %v252, %v1612
  %vm1627 = vcmask 1041408
  %v1628 = vsel %vm1627, %v1626, %v1614
  %vm1629 = vcmask 1042432
  %v1630 = vsel %vm1629, %v1628, %v1616
  %vm1631 = vcmask 1043456
  %v1632 = vsel %vm1631, %v1630, %v1618
  %vm1633 = vcmask 1044480
  %v1634 = vsel %vm1633, %v1632, %v1620
  %vm1635 = vcmask 1045504
  %v1636 = vsel %vm1635, %v1634, %v1240
  %vm1637 = vcmask 1046528
  %v1638 = vsel %vm1637, %v1636, %v1623
  %v1639 = vrot.slane %v1129, 1
  %v1641 = vrot.slane %v845, 3
  %v1643 = vrot.slane %v705, 4
  %v1645 = vrot.slane %v564, 5
  %v1647 = vrot.slane %v422, 6
  %v1649 = vrot.slane %v279, 7
  %v1651 = vsel %vm1625, %v1270, %v1639
  %v1652 = vsel %vm1627, %v1651, %v993
  %v1653 = vsel %vm1629, %v1652, %v1641
  %v1654 = vsel %vm1631, %v1653, %v1643
  %v1655 = vsel %vm1633, %v1654, %v1645
  %v1656 = vsel %vm1635, %v1655, %v1647
  %v1657 = vsel %vm1637, %v1656, %v1649
  %1659 = vrot.lane.b32.xlu0 %v1638, 112
  %v1660 = vpop.permute.xlu0 %1659
  %1663 = vrot.lane.b32.xlu0 %v1657, 80
  %v1664 = vpop.permute.xlu0 %1663
  %v1666 = vsel %vm289, %v1660, %v1664
  %v1668 = vsel %vm60, %v1608, 0
  %v1671 = vsel %vm60, %v1609, 0
  %1673 = vmatprep.subr.mxu0 0.0
  %1674 = vmatpush1.msra.mxu0 %v1666
  %1675 = vmatprep.subr.mxu0 0.0
  %1676 = vmatpush1.msra.mxu0 0.0
  %1677 = vmatprep.subr.mxu0 0.0
  %1678 = vmatpush1.msra.mxu0 0.0
  %1679 = vmatprep.subr.mxu0 0.0
  %1680 = vmatpush1.msra.mxu0 0.0
  %1681 = vmatprep.subr.mxu0 0.0
  %1682 = vmatpush1.msra.mxu0 0.0
  %1683 = vmatprep.subr.mxu0 0.0
  %1684 = vmatpush1.msra.mxu0 0.0
  %1685 = vmatprep.subr.mxu0 0.0
  %1686 = vmatpush1.msra.mxu0 0.0
  %1687 = vmatprep.subr.mxu0 0.0
  %1688 = vmatpush1.msra.mxu0 0.0
  %1689 = vmatprep.subr.mxu0 0.0
  %1690 = vmatpush1.msra.mxu0 0.0
  %1691 = vmatprep.subr.mxu0 0.0
  %1692 = vmatpush1.msra.mxu0 0.0
  %1693 = vmatprep.subr.mxu0 0.0
  %1694 = vmatpush1.msra.mxu0 0.0
  %1695 = vmatprep.subr.mxu0 0.0
  %1696 = vmatpush1.msra.mxu0 0.0
  %1697 = vmatprep.subr.mxu0 0.0
  %1698 = vmatpush1.msra.mxu0 0.0
  %1699 = vmatprep.subr.mxu0 0.0
  %1700 = vmatpush1.msra.mxu0 0.0
  %1701 = vmatprep.subr.mxu0 0.0
  %1702 = vmatpush1.msra.mxu0 0.0
  %1703 = vmatprep.subr.mxu0 0.0
  %1704 = vmatpush1.msra.mxu0 0.0
  %1705 = vmatprep.subr.mxu0 0.0
  %1706 = vmatpush1.msra.mxu0 0.0
  %1707 = vmatprep.subr.mxu0 0.0
  %1708 = vmatpush1.msra.mxu0 0.0
  %1709 = vmatprep.subr.mxu0 0.0
  %1710 = vmatpush1.msra.mxu0 0.0
  %1711 = vmatprep.subr.mxu0 0.0
  %1712 = vmatpush1.msra.mxu0 0.0
  %1713 = vmatprep.subr.mxu0 0.0
  %1714 = vmatpush1.msra.mxu0 0.0
  %1715 = vmatprep.subr.mxu0 0.0
  %1716 = vmatpush1.msra.mxu0 0.0
  %1717 = vmatprep.subr.mxu0 0.0
  %1718 = vmatpush1.msra.mxu0 0.0
  %1719 = vmatprep.subr.mxu0 0.0
  %1720 = vmatpush1.msra.mxu0 0.0
  %1721 = vmatprep.subr.mxu0 0.0
  %1722 = vmatpush1.msra.mxu0 0.0
  %1723 = vmatprep.subr.mxu0 0.0
  %1724 = vmatpush1.msra.mxu0 0.0
  %1725 = vmatprep.subr.mxu0 0.0
  %1726 = vmatpush1.msra.mxu0 0.0
  %1727 = vmatprep.subr.mxu0 0.0
  %1728 = vmatpush1.msra.mxu0 0.0
  %1729 = vmatprep.subr.mxu0 0.0
  %1730 = vmatpush1.msra.mxu0 0.0
  %1731 = vmatprep.subr.mxu0 0.0
  %1732 = vmatpush1.msra.mxu0 0.0
  %1733 = vmatprep.subr.mxu0 0.0
  %1734 = vmatpush1.msra.mxu0 0.0
  %1735 = vmatprep.subr.mxu0 0.0
  %1736 = vmatpush1.msra.mxu0 0.0
  %1737 = vmatprep.mubr.f32.mxu0 0.0
  %1738 = vmatmul.mubr.f32.gmra.mrb[0].mxu0 %v1668
  %v1739 = vpop.f32.mrb[0].mxu0
  %v1740 = vadd.f32 0.0, %v1739
  %v1741 = vpop.f32.mrb[0].mxu0
  %1742 = vmatprep.mubr.f32.mxu0 0.0
  %1743 = vmatmul.mubr.f32.gmra.mrb[0].mxu0 %v1671
  %v1744 = vpop.f32.mrb[0].mxu0
  %v1745 = vadd.f32 0.0, %v1744
  %v1746 = vpop.f32.mrb[0].mxu0
  %1747 = vdwg.mxu0
  %v1748 = vrot.slane %v252, 1
  %v1750 = vrot.slane %v393, 2
  %v1752 = vrot.slane %v536, 3
  %v1754 = vrot.slane %v678, 4
  %v1756 = vrot.slane %v817, 5
  %v1758 = vrot.slane %v1101, 7
  %v1760 = vsel %vm1625, %v1748, %v1750
  %v1761 = vsel %vm1627, %v1760, %v1752
  %v1762 = vsel %vm1629, %v1761, %v1754
  %v1763 = vsel %vm1631, %v1762, %v1756
  %v1764 = vsel %vm1633, %v1763, %v1098
  %v1765 = vsel %vm1635, %v1764, %v1758
  %v1766 = vsel %vm1637, %v1765, %v1243
  %v1768 = vrot.slane %v1270, 1
  %v1770 = vrot.slane %v987, 3
  %v1772 = vrot.slane %v845, 4
  %v1774 = vrot.slane %v705, 5
  %v1777 = vrot.slane %v422, 7
  %v1779 = vsel %vm1625, %v1768, %v1267
  %v1780 = vsel %vm1627, %v1779, %v1770
  %v1781 = vsel %vm1629, %v1780, %v1772
  %v1782 = vsel %vm1631, %v1781, %v1774
  %v1783 = vsel %vm1633, %v1782, %v570
  %v1784 = vsel %vm1635, %v1783, %v1777
  %v1785 = vsel %vm1637, %v1784, %v279
  %1787 = vrot.lane.b32.xlu0 %v1766, 112
  %v1788 = vpop.permute.xlu0 %1787
  %1791 = vrot.lane.b32.xlu0 %v1785, 80
  %v1792 = vpop.permute.xlu0 %1791
  %v1794 = vsel %vm289, %v1788, %v1792
  %v1796 = vsel %vm60, %v1610, 0
  %v1799 = vsel %vm60, %v1611, 0
  %1801 = vmatprep.subr.mxu0 0.0
  %1802 = vmatpush1.msra.mxu0 %v1794
  %1803 = vmatprep.subr.mxu0 0.0
  %1804 = vmatpush1.msra.mxu0 0.0
  %1805 = vmatprep.subr.mxu0 0.0
  %1806 = vmatpush1.msra.mxu0 0.0
  %1807 = vmatprep.subr.mxu0 0.0
  %1808 = vmatpush1.msra.mxu0 0.0
  %1809 = vmatprep.subr.mxu0 0.0
  %1810 = vmatpush1.msra.mxu0 0.0
  %1811 = vmatprep.subr.mxu0 0.0
  %1812 = vmatpush1.msra.mxu0 0.0
  %1813 = vmatprep.subr.mxu0 0.0
  %1814 = vmatpush1.msra.mxu0 0.0
  %1815 = vmatprep.subr.mxu0 0.0
  %1816 = vmatpush1.msra.mxu0 0.0
  %1817 = vmatprep.subr.mxu0 0.0
  %1818 = vmatpush1.msra.mxu0 0.0
  %1819 = vmatprep.subr.mxu0 0.0
  %1820 = vmatpush1.msra.mxu0 0.0
  %1821 = vmatprep.subr.mxu0 0.0
  %1822 = vmatpush1.msra.mxu0 0.0
  %1823 = vmatprep.subr.mxu0 0.0
  %1824 = vmatpush1.msra.mxu0 0.0
  %1825 = vmatprep.subr.mxu0 0.0
  %1826 = vmatpush1.msra.mxu0 0.0
  %1827 = vmatprep.subr.mxu0 0.0
  %1828 = vmatpush1.msra.mxu0 0.0
  %1829 = vmatprep.subr.mxu0 0.0
  %1830 = vmatpush1.msra.mxu0 0.0
  %1831 = vmatprep.subr.mxu0 0.0
  %1832 = vmatpush1.msra.mxu0 0.0
  %1833 = vmatprep.subr.mxu0 0.0
  %1834 = vmatpush1.msra.mxu0 0.0
  %1835 = vmatprep.subr.mxu0 0.0
  %1836 = vmatpush1.msra.mxu0 0.0
  %1837 = vmatprep.subr.mxu0 0.0
  %1838 = vmatpush1.msra.mxu0 0.0
  %1839 = vmatprep.subr.mxu0 0.0
  %1840 = vmatpush1.msra.mxu0 0.0
  %1841 = vmatprep.subr.mxu0 0.0
  %1842 = vmatpush1.msra.mxu0 0.0
  %1843 = vmatprep.subr.mxu0 0.0
  %1844 = vmatpush1.msra.mxu0 0.0
  %1845 = vmatprep.subr.mxu0 0.0
  %1846 = vmatpush1.msra.mxu0 0.0
  %1847 = vmatprep.subr.mxu0 0.0
  %1848 = vmatpush1.msra.mxu0 0.0
  %1849 = vmatprep.subr.mxu0 0.0
  %1850 = vmatpush1.msra.mxu0 0.0
  %1851 = vmatprep.subr.mxu0 0.0
  %1852 = vmatpush1.msra.mxu0 0.0
  %1853 = vmatprep.subr.mxu0 0.0
  %1854 = vmatpush1.msra.mxu0 0.0
  %1855 = vmatprep.subr.mxu0 0.0
  %1856 = vmatpush1.msra.mxu0 0.0
  %1857 = vmatprep.subr.mxu0 0.0
  %1858 = vmatpush1.msra.mxu0 0.0
  %1859 = vmatprep.subr.mxu0 0.0
  %1860 = vmatpush1.msra.mxu0 0.0
  %1861 = vmatprep.subr.mxu0 0.0
  %1862 = vmatpush1.msra.mxu0 0.0
  %1863 = vmatprep.subr.mxu0 0.0
  %1864 = vmatpush1.msra.mxu0 0.0
  %1865 = vmatprep.mubr.f32.mxu0 0.0
  %1866 = vmatmul.mubr.f32.gmra.mrb[0].mxu0 %v1796
  %v1867 = vpop.f32.mrb[0].mxu0
  %v1868 = vadd.f32 0.0, %v1867
  %v1869 = vpop.f32.mrb[0].mxu0
  %1870 = vmatprep.mubr.f32.mxu0 0.0
  %1871 = vmatmul.mubr.f32.gmra.mrb[0].mxu0 %v1799
  %v1872 = vpop.f32.mrb[0].mxu0
  %v1873 = vadd.f32 0.0, %v1872
  %v1874 = vpop.f32.mrb[0].mxu0
  %1875 = vdwg.mxu0
  %v1876 = vld [vmem:[%s11] sm:$0xff]
  %v1877 = vld [vmem:[%s11 + $0x8] sm:$0xff]
  %v1878 = vld [vmem:[%s11 + $0x10] sm:$0xff]
  %v1879 = vld [vmem:[%s11 + $0x18] sm:$0xff]
  %v1880 = vld [vmem:[%s12] sm:$0x1]
  %v1882 = vlaneseq
  %v1883 = vshrl.u32 %v1882, 7
  %v1884 = vsub.s32 0, %v1883
  %v1885 = vrot.slane %v1880, %v1884
  %v1888 = vsel %vm153, %v1740, 0
  %v1891 = vsel %vm153, %v1745, 0
  %v1894 = vsel %vm153, %v1868, 0
  %v1897 = vsel %vm153, %v1873, 0
  %1899 = vmatprep.subr.mxu0 0.0
  %1900 = vmatpush1.msra.mxu0 %v1876
  %1901 = vmatprep.subr.mxu0 0.0
  %1902 = vmatpush1.msra.mxu0 %v1877
  %1903 = vmatprep.subr.mxu0 0.0
  %1904 = vmatpush1.msra.mxu0 %v1878
  %1905 = vmatprep.subr.mxu0 0.0
  %1906 = vmatpush1.msra.mxu0 %v1879
  %1907 = vmatprep.subr.mxu0 0.0
  %1908 = vmatpush1.msra.mxu0 0.0
  %1909 = vmatprep.subr.mxu0 0.0
  %1910 = vmatpush1.msra.mxu0 0.0
  %1911 = vmatprep.subr.mxu0 0.0
  %1912 = vmatpush1.msra.mxu0 0.0
  %1913 = vmatprep.subr.mxu0 0.0
  %1914 = vmatpush1.msra.mxu0 0.0
  %1915 = vmatprep.subr.mxu0 0.0
  %1916 = vmatpush1.msra.mxu0 0.0
  %1917 = vmatprep.subr.mxu0 0.0
  %1918 = vmatpush1.msra.mxu0 0.0
  %1919 = vmatprep.subr.mxu0 0.0
  %1920 = vmatpush1.msra.mxu0 0.0
  %1921 = vmatprep.subr.mxu0 0.0
  %1922 = vmatpush1.msra.mxu0 0.0
  %1923 = vmatprep.subr.mxu0 0.0
  %1924 = vmatpush1.msra.mxu0 0.0
  %1925 = vmatprep.subr.mxu0 0.0
  %1926 = vmatpush1.msra.mxu0 0.0
  %1927 = vmatprep.subr.mxu0 0.0
  %1928 = vmatpush1.msra.mxu0 0.0
  %1929 = vmatprep.subr.mxu0 0.0
  %1930 = vmatpush1.msra.mxu0 0.0
  %1931 = vmatprep.subr.mxu0 0.0
  %1932 = vmatpush1.msra.mxu0 0.0
  %1933 = vmatprep.subr.mxu0 0.0
  %1934 = vmatpush1.msra.mxu0 0.0
  %1935 = vmatprep.subr.mxu0 0.0
  %1936 = vmatpush1.msra.mxu0 0.0
  %1937 = vmatprep.subr.mxu0 0.0
  %1938 = vmatpush1.msra.mxu0 0.0
  %1939 = vmatprep.subr.mxu0 0.0
  %1940 = vmatpush1.msra.mxu0 0.0
  %1941 = vmatprep.subr.mxu0 0.0
  %1942 = vmatpush1.msra.mxu0 0.0
  %1943 = vmatprep.subr.mxu0 0.0
  %1944 = vmatpush1.msra.mxu0 0.0
  %1945 = vmatprep.subr.mxu0 0.0
  %1946 = vmatpush1.msra.mxu0 0.0
  %1947 = vmatprep.subr.mxu0 0.0
  %1948 = vmatpush1.msra.mxu0 0.0
  %1949 = vmatprep.subr.mxu0 0.0
  %1950 = vmatpush1.msra.mxu0 0.0
  %1951 = vmatprep.subr.mxu0 0.0
  %1952 = vmatpush1.msra.mxu0 0.0
  %1953 = vmatprep.subr.mxu0 0.0
  %1954 = vmatpush1.msra.mxu0 0.0
  %1955 = vmatprep.subr.mxu0 0.0
  %1956 = vmatpush1.msra.mxu0 0.0
  %1957 = vmatprep.subr.mxu0 0.0
  %1958 = vmatpush1.msra.mxu0 0.0
  %1959 = vmatprep.subr.mxu0 0.0
  %1960 = vmatpush1.msra.mxu0 0.0
  %1961 = vmatprep.subr.mxu0 0.0
  %1962 = vmatpush1.msra.mxu0 0.0
  %1963 = vmatprep.mubr.f32.mxu0 0.0
  %1964 = vmatmul.mubr.f32.gmra.mrb[0].mxu0 %v1888
  %v1965 = vpop.f32.mrb[0].mxu0
  %v1966 = vadd.f32 %v1885, %v1965
  %v1967 = vpop.f32.mrb[0].mxu0
  %1968 = vmatprep.mubr.f32.mxu0 0.0
  %1969 = vmatmul.mubr.f32.gmra.mrb[0].mxu0 %v1891
  %v1970 = vpop.f32.mrb[0].mxu0
  %v1971 = vadd.f32 %v1885, %v1970
  %v1972 = vpop.f32.mrb[0].mxu0
  %1973 = vmatprep.mubr.f32.mxu0 0.0
  %1974 = vmatmul.mubr.f32.gmra.mrb[0].mxu0 %v1894
  %v1975 = vpop.f32.mrb[0].mxu0
  %v1976 = vadd.f32 %v1885, %v1975
  %v1977 = vpop.f32.mrb[0].mxu0
  %1978 = vmatprep.mubr.f32.mxu0 0.0
  %1979 = vmatmul.mubr.f32.gmra.mrb[0].mxu0 %v1897
  %v1980 = vpop.f32.mrb[0].mxu0
  %v1981 = vadd.f32 %v1885, %v1980
  %v1982 = vpop.f32.mrb[0].mxu0
  %1983 = vdwg.mxu0
  %v1984 = vmax.f32 %v1966, 0.0
  %v1985 = vmax.f32 %v1971, 0.0
  %v1986 = vmax.f32 %v1976, 0.0
  %v1987 = vmax.f32 %v1981, 0.0
  %v1988 = vld [vmem:[%s13] sm:$0xff]
  %v1989 = vld [vmem:[%s13 + $0x8] sm:$0xff]
  %v1990 = vld [vmem:[%s13 + $0x10] sm:$0xff]
  %v1991 = vld [vmem:[%s13 + $0x18] sm:$0xff]
  %v1992 = vld [vmem:[%s13 + $0x20] sm:$0xff]
  %v1993 = vld [vmem:[%s13 + $0x28] sm:$0xff]
  %v1994 = vld [vmem:[%s13 + $0x30] sm:$0x3]
  %v1995 = vld [vmem:[%s14] sm:$0x1]
  %v1997 = vlaneseq
  %v1998 = vshrl.u32 %v1997, 7
  %v1999 = vsub.s32 0, %v1998
  %v2000 = vrot.slane %v1995, %v1999
  %vm2002 = vcmask 408576
  %v2004 = vsel %vm2002, %v1984, 0
  %v2007 = vsel %vm2002, %v1985, 0
  %v2010 = vsel %vm2002, %v1986, 0
  %v2013 = vsel %vm2002, %v1987, 0
  %v2016 = vsel %vm1627, %v1994, 0
  %2018 = vmatprep.subr.mxu0 0.0
  %2019 = vmatpush1.msra.mxu0 %v1988
  %2020 = vmatprep.subr.mxu0 0.0
  %2021 = vmatpush1.msra.mxu0 %v1989
  %2022 = vmatprep.subr.mxu0 0.0
  %2023 = vmatpush1.msra.mxu0 %v1990
  %2024 = vmatprep.subr.mxu0 0.0
  %2025 = vmatpush1.msra.mxu0 %v1991
  %2026 = vmatprep.subr.mxu0 0.0
  %2027 = vmatpush1.msra.mxu0 %v1992
  %2028 = vmatprep.subr.mxu0 0.0
  %2029 = vmatpush1.msra.mxu0 %v1993
  %2030 = vmatprep.subr.mxu0 0.0
  %2031 = vmatpush1.msra.mxu0 %v2016
  %2032 = vmatprep.subr.mxu0 0.0
  %2033 = vmatpush1.msra.mxu0 0.0
  %2034 = vmatprep.subr.mxu0 0.0
  %2035 = vmatpush1.msra.mxu0 0.0
  %2036 = vmatprep.subr.mxu0 0.0
  %2037 = vmatpush1.msra.mxu0 0.0
  %2038 = vmatprep.subr.mxu0 0.0
  %2039 = vmatpush1.msra.mxu0 0.0
  %2040 = vmatprep.subr.mxu0 0.0
  %2041 = vmatpush1.msra.mxu0 0.0
  %2042 = vmatprep.subr.mxu0 0.0
  %2043 = vmatpush1.msra.mxu0 0.0
  %2044 = vmatprep.subr.mxu0 0.0
  %2045 = vmatpush1.msra.mxu0 0.0
  %2046 = vmatprep.subr.mxu0 0.0
  %2047 = vmatpush1.msra.mxu0 0.0
  %2048 = vmatprep.subr.mxu0 0.0
  %2049 = vmatpush1.msra.mxu0 0.0
  %2050 = vmatprep.subr.mxu0 0.0
  %2051 = vmatpush1.msra.mxu0 0.0
  %2052 = vmatprep.subr.mxu0 0.0
  %2053 = vmatpush1.msra.mxu0 0.0
  %2054 = vmatprep.subr.mxu0 0.0
  %2055 = vmatpush1.msra.mxu0 0.0
  %2056 = vmatprep.subr.mxu0 0.0
  %2057 = vmatpush1.msra.mxu0 0.0
  %2058 = vmatprep.subr.mxu0 0.0
  %2059 = vmatpush1.msra.mxu0 0.0
  %2060 = vmatprep.subr.mxu0 0.0
  %2061 = vmatpush1.msra.mxu0 0.0
  %2062 = vmatprep.subr.mxu0 0.0
  %2063 = vmatpush1.msra.mxu0 0.0
  %2064 = vmatprep.subr.mxu0 0.0
  %2065 = vmatpush1.msra.mxu0 0.0
  %2066 = vmatprep.subr.mxu0 0.0
  %2067 = vmatpush1.msra.mxu0 0.0
  %2068 = vmatprep.subr.mxu0 0.0
  %2069 = vmatpush1.msra.mxu0 0.0
  %2070 = vmatprep.subr.mxu0 0.0
  %2071 = vmatpush1.msra.mxu0 0.0
  %2072 = vmatprep.subr.mxu0 0.0
  %2073 = vmatpush1.msra.mxu0 0.0
  %2074 = vmatprep.subr.mxu0 0.0
  %2075 = vmatpush1.msra.mxu0 0.0
  %2076 = vmatprep.subr.mxu0 0.0
  %2077 = vmatpush1.msra.mxu0 0.0
  %2078 = vmatprep.subr.mxu0 0.0
  %2079 = vmatpush1.msra.mxu0 0.0
  %2080 = vmatprep.subr.mxu0 0.0
  %2081 = vmatpush1.msra.mxu0 0.0
  %2082 = vmatprep.mubr.f32.mxu0 0.0
  %2083 = vmatmul.mubr.f32.gmra.mrb[0].mxu0 %v2004
  %v2084 = vpop.f32.mrb[0].mxu0
  %v2085 = vadd.f32 %v2000, %v2084
  %v2086 = vpop.f32.mrb[0].mxu0
  %2087 = vmatprep.mubr.f32.mxu0 0.0
  %2088 = vmatmul.mubr.f32.gmra.mrb[0].mxu0 %v2007
  %v2089 = vpop.f32.mrb[0].mxu0
  %v2090 = vadd.f32 %v2000, %v2089
  %v2091 = vpop.f32.mrb[0].mxu0
  %2092 = vmatprep.mubr.f32.mxu0 0.0
  %2093 = vmatmul.mubr.f32.gmra.mrb[0].mxu0 %v2010
  %v2094 = vpop.f32.mrb[0].mxu0
  %v2095 = vadd.f32 %v2000, %v2094
  %v2096 = vpop.f32.mrb[0].mxu0
  %2097 = vmatprep.mubr.f32.mxu0 0.0
  %2098 = vmatmul.mubr.f32.gmra.mrb[0].mxu0 %v2013
  %v2099 = vpop.f32.mrb[0].mxu0
  %v2100 = vadd.f32 %v2000, %v2099
  %v2101 = vpop.f32.mrb[0].mxu0
  %2102 = vdwg.mxu0
  %vm2103 = vcmask 31744
  %2104 = vst.msk [vmem:[%s15] sm:$0xff] %vm2103, %v2085
  %2105 = vst.msk [vmem:[%s15 + $0x8] sm:$0xff] %vm2103, %v2090
  %2106 = vst.msk [vmem:[%s15 + $0x10] sm:$0xff] %vm2103, %v2095
  %2107 = vst.msk [vmem:[%s15 + $0x18] sm:$0xff] %vm2103, %v2100
  // Predicated region
  $region62: #{dec_mtan_rnn_forward.1} parent=0 // pred_check
    _
  $region63: #{dec_mtan_rnn_forward.1} parent=0 // pred_check_branch
    %2109 = sbr.rel (0) target = $region65
  $region64: #{dec_mtan_rnn_forward.1} parent=0 // pred_region
    _
  $region65: #{dec_mtan_rnn_forward.1} parent=0 // pred_fallthru
    _
  // Predicated region
  $region66: #{dec_mtan_rnn_forward.1} parent=0 // pred_check
    _
  $region67: #{dec_mtan_rnn_forward.1} parent=0 // pred_check_branch
    %2111 = sbr.rel (0) target = $region69
  $region68: #{dec_mtan_rnn_forward.1} parent=0 // pred_region
    _
  $region69: #{dec_mtan_rnn_forward.1} parent=0 // pred_fallthru
    _

</llo_original>
